<compile_context>
chip_gen: v7x
topology: tpu7x:2x2x1
jax: 0.10.0
libtpu: 0.0.40
codegen_flags: <defaults>
</compile_context>

<pallas_src>
import jax
import jax.numpy as jnp
from jax.experimental import pallas as pl
from jax.experimental.pallas import tpu as pltpu

EPS = 1e-5
NEG_SLOPE = 0.01

N_W4_CHUNKS = 4          # chunk the (512, 1024) w4 DMA along the output axis
W4_N = 1024
W4_CHUNK = W4_N // N_W4_CHUNKS   # 256 lanes per chunk (multiple of 128)


def _bn_train(x, gamma, beta):
    # Training-mode BatchNorm1d: batch mean / biased batch variance,
    # with gamma folded into the normalization scale (one full-width mul).
    mean = jnp.mean(x, axis=0, keepdims=True)
    centered = x - mean
    var = jnp.mean(jnp.square(centered), axis=0, keepdims=True)
    scale = gamma * jax.lax.rsqrt(var + EPS)          # (1, F): cheap
    return centered * scale + beta


def _leaky_relu(x):
    # Identical to where(x>=0, x, a*x) for a in (0, 1); single max per element.
    return jnp.maximum(x, NEG_SLOPE * x)


def decoder_kernel(h_ref,
                   w1_ref, g1_ref, bt1_ref,
                   w2_ref, g2_ref, bt2_ref,
                   w3_hbm_ref, g3_ref, bt3_ref,
                   w4_hbm_ref, b4_ref,
                   o_ref,
                   w3_vmem, w4_vmem, w3_sem, w4_sem):
    # Kick off the manual weight fetches immediately so their HBM->VMEM DMA is
    # hidden behind the compute of the earlier layers.
    w3_copy = pltpu.make_async_copy(w3_hbm_ref, w3_vmem, w3_sem)
    w3_copy.start()

    w4_copies = []
    for c in range(N_W4_CHUNKS):
        lo, hi = c * W4_CHUNK, (c + 1) * W4_CHUNK
        cp = pltpu.make_async_copy(w4_hbm_ref.at[:, lo:hi],
                                   w4_vmem.at[:, lo:hi],
                                   w4_sem.at[c])
        cp.start()
        w4_copies.append(cp)

    x = h_ref[...]

    # Linear(64, 256) -> BN(256) -> LeakyReLU.
    # Linear bias omitted: it is cancelled exactly by BN's mean subtraction.
    x = jnp.dot(x.astype(jnp.bfloat16), w1_ref[...],
                preferred_element_type=jnp.float32)
    x = _leaky_relu(_bn_train(x, g1_ref[...], bt1_ref[...]))

    # Linear(256, 256) -> BN(256) -> LeakyReLU
    x = jnp.dot(x.astype(jnp.bfloat16), w2_ref[...],
                preferred_element_type=jnp.float32)
    x = _leaky_relu(_bn_train(x, g2_ref[...], bt2_ref[...]))

    # Linear(256, 512) -> BN(512) -> LeakyReLU
    w3_copy.wait()
    x = jnp.dot(x.astype(jnp.bfloat16), w3_vmem[...],
                preferred_element_type=jnp.float32)
    x = _leaky_relu(_bn_train(x, g3_ref[...], bt3_ref[...]))

    # Linear(512, 1024) -> Sigmoid, computed per 256-wide column chunk as each
    # w4 slab's DMA completes (overlaps the DMA tail with MXU + EUP + store).
    x_bf16 = x.astype(jnp.bfloat16)
    for c in range(N_W4_CHUNKS):
        w4_copies[c].wait()
        lo, hi = c * W4_CHUNK, (c + 1) * W4_CHUNK
        y = jnp.dot(x_bf16, w4_vmem[:, lo:hi],
                    preferred_element_type=jnp.float32)
        y = y + b4_ref[:, lo:hi]            # bias kept: no BN after this layer
        o_ref[:, lo:hi] = jax.nn.sigmoid(y)


def _full_block(a):
    ndim = a.ndim
    # grid=(): index_map takes no grid args; bind ndim explicitly.
    return pl.BlockSpec(a.shape, lambda: (0,) * ndim)


def omniglot_decoder(h, params):
    """h: (B, 64) float32.  params: dict of weights (see init_params)."""
    B = h.shape[0]
    args = (
        h,
        params["w1"], params["g1"], params["bt1"],
        params["w2"], params["g2"], params["bt2"],
        params["w3"], params["g3"], params["bt3"],
        params["w4"], params["b4"],
    )
    in_specs = [_full_block(a) for a in args]
    # w3 and w4 stay in HBM; the kernel DMAs them into VMEM scratch itself so
    # the copies overlap earlier-layer compute instead of sitting in the
    # serialized grid=() input prologue.
    W3_IDX, W4_IDX = 7, 10
    in_specs[W3_IDX] = pl.BlockSpec(memory_space=pl.ANY)
    in_specs[W4_IDX] = pl.BlockSpec(memory_space=pl.ANY)

    return pl.pallas_call(
        decoder_kernel,
        out_shape=jax.ShapeDtypeStruct((B, 1024), jnp.float32),
        grid=(),
        in_specs=in_specs,
        out_specs=pl.BlockSpec((B, 1024), lambda: (0, 0)),
        scratch_shapes=[
            pltpu.VMEM(params["w3"].shape, params["w3"].dtype),  # w3 landing buf
            pltpu.VMEM(params["w4"].shape, params["w4"].dtype),  # w4 landing buf
            pltpu.SemaphoreType.DMA(()),                         # w3 DMA sem
            pltpu.SemaphoreType.DMA((N_W4_CHUNKS,)),             # w4 chunk sems
        ],
        compiler_params=pltpu.CompilerParams(vmem_limit_bytes=16 << 20),
    )(*args)


def init_params(key):
    """Deterministic synthetic parameters matching the PyTorch module shapes.

    Linear weights are stored in bfloat16 (pre-transposed to (in, out)) to
    halve HBM weight traffic; biases and BatchNorm affine params stay float32.
    """
    sizes = [(64, 256), (256, 256), (256, 512), (512, 1024)]
    params = {}
    keys = jax.random.split(key, 16)
    ki = 0
    for idx, (fan_in, fan_out) in enumerate(sizes, start=1):
        bound = 1.0 / (fan_in ** 0.5)
        w = jax.random.uniform(keys[ki], (fan_in, fan_out), jnp.float32,
                               -bound, bound); ki += 1
        params[f"w{idx}"] = w.astype(jnp.bfloat16)
        params[f"b{idx}"] = jax.random.uniform(
            keys[ki], (1, fan_out), jnp.float32, -bound, bound); ki += 1
        if idx < 4:  # BatchNorm affine params for the first three layers
            params[f"g{idx}"] = 1.0 + 0.1 * jax.random.normal(
                keys[ki], (1, fan_out), jnp.float32); ki += 1
            params[f"bt{idx}"] = 0.1 * jax.random.normal(
                keys[ki], (1, fan_out), jnp.float32); ki += 1
    return params


def reference_forward(h, p):
    """Pure-JAX reference of the PyTorch forward (training-mode BN).

    Mirrors the kernel's MXU precision (bf16 activations x bf16 weights with
    f32 accumulation) and includes the b1..b3 bias adds exactly as in the
    nn.Sequential; the kernel drops them because BN's mean subtraction cancels
    them mathematically.
    """
    x = h
    for idx in range(1, 4):
        x = jnp.dot(x.astype(jnp.bfloat16), p[f"w{idx}"],
                    preferred_element_type=jnp.float32) + p[f"b{idx}"]
        x = _leaky_relu(_bn_train(x, p[f"g{idx}"], p[f"bt{idx}"]))
    x = jnp.dot(x.astype(jnp.bfloat16), p["w4"],
                preferred_element_type=jnp.float32) + p["b4"]
    return jax.nn.sigmoid(x)


if __name__ == "__main__":
    key = jax.random.PRNGKey(0)
    pkey, hkey = jax.random.split(key)
    params = init_params(pkey)

    B = 8  # batch (sublane-aligned); input latent dim is 64 per the module
    h = jax.random.normal(hkey, (B, 64), jnp.float32)

    out = omniglot_decoder(h, params)
    out = jax.block_until_ready(out)

    ref = reference_forward(h, params)
    assert out.shape == (B, 1024)
    # Tolerance covers MXU-vs-XLA bf16 accumulation-order differences plus the
    # (mathematically exact) bias-before-BN cancellation done numerically.
    assert jnp.allclose(out, ref, atol=2e-3, rtol=2e-3), "mismatch vs reference"

    print("KERNEL_OK")
</pallas_src>

<mosaic_0001>
module attributes {stable_mosaic.version = 11 : i64} {
  func.func @decoder_kernel(%arg0: memref<8x64xf32, #tpu.memory_space<vmem>>, %arg1: memref<64x256xbf16, #tpu.memory_space<vmem>>, %arg2: memref<1x256xf32, #tpu.memory_space<vmem>>, %arg3: memref<1x256xf32, #tpu.memory_space<vmem>>, %arg4: memref<256x256xbf16, #tpu.memory_space<vmem>>, %arg5: memref<1x256xf32, #tpu.memory_space<vmem>>, %arg6: memref<1x256xf32, #tpu.memory_space<vmem>>, %arg7: memref<256x512xbf16, #tpu.memory_space<any>>, %arg8: memref<1x512xf32, #tpu.memory_space<vmem>>, %arg9: memref<1x512xf32, #tpu.memory_space<vmem>>, %arg10: memref<512x1024xbf16, #tpu.memory_space<any>>, %arg11: memref<1x1024xf32, #tpu.memory_space<vmem>>, %arg12: memref<8x1024xf32, #tpu.memory_space<vmem>>, %arg13: memref<256x512xbf16, #tpu.memory_space<vmem>>, %arg14: memref<512x1024xbf16, #tpu.memory_space<vmem>>, %arg15: memref<!tpu.dma_semaphore, #tpu.memory_space<semaphore_mem>>, %arg16: memref<4x!tpu.dma_semaphore, #tpu.memory_space<semaphore_mem>>) attributes {dimension_semantics = [], scalar_prefetch = 0 : i64, scratch_operands = 4 : i64, tpu.core_type = #tpu.core_type<tc>} {
    tpu.enqueue_dma source(%arg7 : memref<256x512xbf16, #tpu.memory_space<any>>) target(%arg13 : memref<256x512xbf16, #tpu.memory_space<vmem>>) target_semaphore(%arg15 : memref<!tpu.dma_semaphore, #tpu.memory_space<semaphore_mem>>)
    %c0_i32 = arith.constant 0 : i32
    %c0_i32_0 = arith.constant 0 : i32
    %c0_i32_1 = arith.constant 0 : i32
    %0 = tpu.memref_slice %arg10[%c0_i32_0, %c0_i32_1] : memref<512x1024xbf16, #tpu.memory_space<any>> -> memref<512x256xbf16, #tpu.memory_space<any>>
    %c0_i32_2 = arith.constant 0 : i32
    %c0_i32_3 = arith.constant 0 : i32
    %1 = tpu.memref_slice %arg14[%c0_i32_2, %c0_i32_3] : memref<512x1024xbf16, #tpu.memory_space<vmem>> -> memref<512x256xbf16, #tpu.memory_space<vmem>>
    %2 = tpu.memref_slice %arg16[%c0_i32] : memref<4x!tpu.dma_semaphore, #tpu.memory_space<semaphore_mem>> -> memref<1x!tpu.dma_semaphore, #tpu.memory_space<semaphore_mem>>
    %3 = tpu.memref_squeeze %2 : memref<1x!tpu.dma_semaphore, #tpu.memory_space<semaphore_mem>> -> memref<!tpu.dma_semaphore, #tpu.memory_space<semaphore_mem>>
    tpu.enqueue_dma source(%0 : memref<512x256xbf16, #tpu.memory_space<any>>) target(%1 : memref<512x256xbf16, #tpu.memory_space<vmem>>) target_semaphore(%3 : memref<!tpu.dma_semaphore, #tpu.memory_space<semaphore_mem>>)
    %c1_i32 = arith.constant 1 : i32
    %c0_i32_4 = arith.constant 0 : i32
    %c256_i32 = arith.constant 256 : i32
    %4 = tpu.memref_slice %arg10[%c0_i32_4, %c256_i32] : memref<512x1024xbf16, #tpu.memory_space<any>> -> memref<512x256xbf16, #tpu.memory_space<any>>
    %c0_i32_5 = arith.constant 0 : i32
    %c256_i32_6 = arith.constant 256 : i32
    %5 = tpu.memref_slice %arg14[%c0_i32_5, %c256_i32_6] : memref<512x1024xbf16, #tpu.memory_space<vmem>> -> memref<512x256xbf16, #tpu.memory_space<vmem>>
    %6 = tpu.memref_slice %arg16[%c1_i32] : memref<4x!tpu.dma_semaphore, #tpu.memory_space<semaphore_mem>> -> memref<1x!tpu.dma_semaphore, #tpu.memory_space<semaphore_mem>>
    %7 = tpu.memref_squeeze %6 : memref<1x!tpu.dma_semaphore, #tpu.memory_space<semaphore_mem>> -> memref<!tpu.dma_semaphore, #tpu.memory_space<semaphore_mem>>
    tpu.enqueue_dma source(%4 : memref<512x256xbf16, #tpu.memory_space<any>>) target(%5 : memref<512x256xbf16, #tpu.memory_space<vmem>>) target_semaphore(%7 : memref<!tpu.dma_semaphore, #tpu.memory_space<semaphore_mem>>)
    %c2_i32 = arith.constant 2 : i32
    %c0_i32_7 = arith.constant 0 : i32
    %c512_i32 = arith.constant 512 : i32
    %8 = tpu.memref_slice %arg10[%c0_i32_7, %c512_i32] : memref<512x1024xbf16, #tpu.memory_space<any>> -> memref<512x256xbf16, #tpu.memory_space<any>>
    %c0_i32_8 = arith.constant 0 : i32
    %c512_i32_9 = arith.constant 512 : i32
    %9 = tpu.memref_slice %arg14[%c0_i32_8, %c512_i32_9] : memref<512x1024xbf16, #tpu.memory_space<vmem>> -> memref<512x256xbf16, #tpu.memory_space<vmem>>
    %10 = tpu.memref_slice %arg16[%c2_i32] : memref<4x!tpu.dma_semaphore, #tpu.memory_space<semaphore_mem>> -> memref<1x!tpu.dma_semaphore, #tpu.memory_space<semaphore_mem>>
    %11 = tpu.memref_squeeze %10 : memref<1x!tpu.dma_semaphore, #tpu.memory_space<semaphore_mem>> -> memref<!tpu.dma_semaphore, #tpu.memory_space<semaphore_mem>>
    tpu.enqueue_dma source(%8 : memref<512x256xbf16, #tpu.memory_space<any>>) target(%9 : memref<512x256xbf16, #tpu.memory_space<vmem>>) target_semaphore(%11 : memref<!tpu.dma_semaphore, #tpu.memory_space<semaphore_mem>>)
    %c3_i32 = arith.constant 3 : i32
    %c0_i32_10 = arith.constant 0 : i32
    %c768_i32 = arith.constant 768 : i32
    %12 = tpu.memref_slice %arg10[%c0_i32_10, %c768_i32] : memref<512x1024xbf16, #tpu.memory_space<any>> -> memref<512x256xbf16, #tpu.memory_space<any>>
    %c0_i32_11 = arith.constant 0 : i32
    %c768_i32_12 = arith.constant 768 : i32
    %13 = tpu.memref_slice %arg14[%c0_i32_11, %c768_i32_12] : memref<512x1024xbf16, #tpu.memory_space<vmem>> -> memref<512x256xbf16, #tpu.memory_space<vmem>>
    %14 = tpu.memref_slice %arg16[%c3_i32] : memref<4x!tpu.dma_semaphore, #tpu.memory_space<semaphore_mem>> -> memref<1x!tpu.dma_semaphore, #tpu.memory_space<semaphore_mem>>
    %15 = tpu.memref_squeeze %14 : memref<1x!tpu.dma_semaphore, #tpu.memory_space<semaphore_mem>> -> memref<!tpu.dma_semaphore, #tpu.memory_space<semaphore_mem>>
    tpu.enqueue_dma source(%12 : memref<512x256xbf16, #tpu.memory_space<any>>) target(%13 : memref<512x256xbf16, #tpu.memory_space<vmem>>) target_semaphore(%15 : memref<!tpu.dma_semaphore, #tpu.memory_space<semaphore_mem>>)
    %c0 = arith.constant 0 : index
    %c0_13 = arith.constant 0 : index
    %16 = vector.load %arg0[%c0, %c0_13] : memref<8x64xf32, #tpu.memory_space<vmem>>, vector<8x64xf32>
    %17 = arith.truncf %16 : vector<8x64xf32> to vector<8x64xbf16>
    %c0_14 = arith.constant 0 : index
    %c0_15 = arith.constant 0 : index
    %18 = vector.load %arg1[%c0_14, %c0_15] : memref<64x256xbf16, #tpu.memory_space<vmem>>, vector<64x256xbf16>
    %cst = arith.constant dense<0.000000e+00> : vector<8x256xf32>
    %19 = tpu.matmul %17, %18, %cst {dimension_numbers = #tpu.dot_dimension_numbers<[1], [0], [0], [1], [0, 0, 1, 1], [], []>} : vector<8x64xbf16>, vector<64x256xbf16>, vector<8x256xf32> -> vector<8x256xf32>
    %c0_16 = arith.constant 0 : index
    %c0_17 = arith.constant 0 : index
    %20 = vector.load %arg2[%c0_16, %c0_17] : memref<1x256xf32, #tpu.memory_space<vmem>>, vector<1x256xf32>
    %c0_18 = arith.constant 0 : index
    %c0_19 = arith.constant 0 : index
    %21 = vector.load %arg3[%c0_18, %c0_19] : memref<1x256xf32, #tpu.memory_space<vmem>>, vector<1x256xf32>
    %cst_20 = arith.constant dense<0.000000e+00> : vector<256xf32>
    %22 = vector.multi_reduction <add>, %19, %cst_20 [0] : vector<8x256xf32> to vector<256xf32>
    %23 = vector.shape_cast %22 : vector<256xf32> to vector<1x256xf32>
    %cst_21 = arith.constant 8.000000e+00 : f32
    %24 = vector.broadcast %cst_21 : f32 to vector<1x256xf32>
    %25 = arith.divf %23, %24 : vector<1x256xf32>
    %26 = vector.broadcast %25 : vector<1x256xf32> to vector<8x256xf32>
    %27 = arith.subf %19, %26 : vector<8x256xf32>
    %28 = arith.mulf %27, %27 : vector<8x256xf32>
    %cst_22 = arith.constant dense<0.000000e+00> : vector<256xf32>
    %29 = vector.multi_reduction <add>, %28, %cst_22 [0] : vector<8x256xf32> to vector<256xf32>
    %30 = vector.shape_cast %29 : vector<256xf32> to vector<1x256xf32>
    %cst_23 = arith.constant 8.000000e+00 : f32
    %31 = vector.broadcast %cst_23 : f32 to vector<1x256xf32>
    %32 = arith.divf %30, %31 : vector<1x256xf32>
    %cst_24 = arith.constant 9.99999974E-6 : f32
    %33 = vector.broadcast %cst_24 : f32 to vector<1x256xf32>
    %34 = arith.addf %32, %33 : vector<1x256xf32>
    %35 = math.rsqrt %34 : vector<1x256xf32>
    %36 = arith.mulf %20, %35 : vector<1x256xf32>
    %37 = vector.broadcast %36 : vector<1x256xf32> to vector<8x256xf32>
    %38 = arith.mulf %27, %37 : vector<8x256xf32>
    %39 = vector.broadcast %21 : vector<1x256xf32> to vector<8x256xf32>
    %40 = arith.addf %38, %39 : vector<8x256xf32>
    %cst_25 = arith.constant 0.00999999977 : f32
    %41 = vector.broadcast %cst_25 : f32 to vector<8x256xf32>
    %42 = arith.mulf %41, %40 : vector<8x256xf32>
    %43 = arith.maximumf %40, %42 : vector<8x256xf32>
    %44 = arith.truncf %43 : vector<8x256xf32> to vector<8x256xbf16>
    %c0_26 = arith.constant 0 : index
    %c0_27 = arith.constant 0 : index
    %45 = vector.load %arg4[%c0_26, %c0_27] : memref<256x256xbf16, #tpu.memory_space<vmem>>, vector<256x256xbf16>
    %cst_28 = arith.constant dense<0.000000e+00> : vector<8x256xf32>
    %46 = tpu.matmul %44, %45, %cst_28 {dimension_numbers = #tpu.dot_dimension_numbers<[1], [0], [0], [1], [0, 0, 1, 1], [], []>} : vector<8x256xbf16>, vector<256x256xbf16>, vector<8x256xf32> -> vector<8x256xf32>
    %c0_29 = arith.constant 0 : index
    %c0_30 = arith.constant 0 : index
    %47 = vector.load %arg5[%c0_29, %c0_30] : memref<1x256xf32, #tpu.memory_space<vmem>>, vector<1x256xf32>
    %c0_31 = arith.constant 0 : index
    %c0_32 = arith.constant 0 : index
    %48 = vector.load %arg6[%c0_31, %c0_32] : memref<1x256xf32, #tpu.memory_space<vmem>>, vector<1x256xf32>
    %cst_33 = arith.constant dense<0.000000e+00> : vector<256xf32>
    %49 = vector.multi_reduction <add>, %46, %cst_33 [0] : vector<8x256xf32> to vector<256xf32>
    %50 = vector.shape_cast %49 : vector<256xf32> to vector<1x256xf32>
    %cst_34 = arith.constant 8.000000e+00 : f32
    %51 = vector.broadcast %cst_34 : f32 to vector<1x256xf32>
    %52 = arith.divf %50, %51 : vector<1x256xf32>
    %53 = vector.broadcast %52 : vector<1x256xf32> to vector<8x256xf32>
    %54 = arith.subf %46, %53 : vector<8x256xf32>
    %55 = arith.mulf %54, %54 : vector<8x256xf32>
    %cst_35 = arith.constant dense<0.000000e+00> : vector<256xf32>
    %56 = vector.multi_reduction <add>, %55, %cst_35 [0] : vector<8x256xf32> to vector<256xf32>
    %57 = vector.shape_cast %56 : vector<256xf32> to vector<1x256xf32>
    %cst_36 = arith.constant 8.000000e+00 : f32
    %58 = vector.broadcast %cst_36 : f32 to vector<1x256xf32>
    %59 = arith.divf %57, %58 : vector<1x256xf32>
    %cst_37 = arith.constant 9.99999974E-6 : f32
    %60 = vector.broadcast %cst_37 : f32 to vector<1x256xf32>
    %61 = arith.addf %59, %60 : vector<1x256xf32>
    %62 = math.rsqrt %61 : vector<1x256xf32>
    %63 = arith.mulf %47, %62 : vector<1x256xf32>
    %64 = vector.broadcast %63 : vector<1x256xf32> to vector<8x256xf32>
    %65 = arith.mulf %54, %64 : vector<8x256xf32>
    %66 = vector.broadcast %48 : vector<1x256xf32> to vector<8x256xf32>
    %67 = arith.addf %65, %66 : vector<8x256xf32>
    %cst_38 = arith.constant 0.00999999977 : f32
    %68 = vector.broadcast %cst_38 : f32 to vector<8x256xf32>
    %69 = arith.mulf %68, %67 : vector<8x256xf32>
    %70 = arith.maximumf %67, %69 : vector<8x256xf32>
    tpu.wait_dma2 semaphore(%arg15 : memref<!tpu.dma_semaphore, #tpu.memory_space<semaphore_mem>>) src(%arg7 : memref<256x512xbf16, #tpu.memory_space<any>>) dst(%arg13 : memref<256x512xbf16, #tpu.memory_space<vmem>>)
    %71 = arith.truncf %70 : vector<8x256xf32> to vector<8x256xbf16>
    %c0_39 = arith.constant 0 : index
    %c0_40 = arith.constant 0 : index
    %72 = vector.load %arg13[%c0_39, %c0_40] : memref<256x512xbf16, #tpu.memory_space<vmem>>, vector<256x512xbf16>
    %cst_41 = arith.constant dense<0.000000e+00> : vector<8x512xf32>
    %73 = tpu.matmul %71, %72, %cst_41 {dimension_numbers = #tpu.dot_dimension_numbers<[1], [0], [0], [1], [0, 0, 1, 1], [], []>} : vector<8x256xbf16>, vector<256x512xbf16>, vector<8x512xf32> -> vector<8x512xf32>
    %c0_42 = arith.constant 0 : index
    %c0_43 = arith.constant 0 : index
    %74 = vector.load %arg8[%c0_42, %c0_43] : memref<1x512xf32, #tpu.memory_space<vmem>>, vector<1x512xf32>
    %c0_44 = arith.constant 0 : index
    %c0_45 = arith.constant 0 : index
    %75 = vector.load %arg9[%c0_44, %c0_45] : memref<1x512xf32, #tpu.memory_space<vmem>>, vector<1x512xf32>
    %cst_46 = arith.constant dense<0.000000e+00> : vector<512xf32>
    %76 = vector.multi_reduction <add>, %73, %cst_46 [0] : vector<8x512xf32> to vector<512xf32>
    %77 = vector.shape_cast %76 : vector<512xf32> to vector<1x512xf32>
    %cst_47 = arith.constant 8.000000e+00 : f32
    %78 = vector.broadcast %cst_47 : f32 to vector<1x512xf32>
    %79 = arith.divf %77, %78 : vector<1x512xf32>
    %80 = vector.broadcast %79 : vector<1x512xf32> to vector<8x512xf32>
    %81 = arith.subf %73, %80 : vector<8x512xf32>
    %82 = arith.mulf %81, %81 : vector<8x512xf32>
    %cst_48 = arith.constant dense<0.000000e+00> : vector<512xf32>
    %83 = vector.multi_reduction <add>, %82, %cst_48 [0] : vector<8x512xf32> to vector<512xf32>
    %84 = vector.shape_cast %83 : vector<512xf32> to vector<1x512xf32>
    %cst_49 = arith.constant 8.000000e+00 : f32
    %85 = vector.broadcast %cst_49 : f32 to vector<1x512xf32>
    %86 = arith.divf %84, %85 : vector<1x512xf32>
    %cst_50 = arith.constant 9.99999974E-6 : f32
    %87 = vector.broadcast %cst_50 : f32 to vector<1x512xf32>
    %88 = arith.addf %86, %87 : vector<1x512xf32>
    %89 = math.rsqrt %88 : vector<1x512xf32>
    %90 = arith.mulf %74, %89 : vector<1x512xf32>
    %91 = vector.broadcast %90 : vector<1x512xf32> to vector<8x512xf32>
    %92 = arith.mulf %81, %91 : vector<8x512xf32>
    %93 = vector.broadcast %75 : vector<1x512xf32> to vector<8x512xf32>
    %94 = arith.addf %92, %93 : vector<8x512xf32>
    %cst_51 = arith.constant 0.00999999977 : f32
    %95 = vector.broadcast %cst_51 : f32 to vector<8x512xf32>
    %96 = arith.mulf %95, %94 : vector<8x512xf32>
    %97 = arith.maximumf %94, %96 : vector<8x512xf32>
    %98 = arith.truncf %97 : vector<8x512xf32> to vector<8x512xbf16>
    %c0_i32_52 = arith.constant 0 : i32
    %c0_i32_53 = arith.constant 0 : i32
    %c0_i32_54 = arith.constant 0 : i32
    %99 = tpu.memref_slice %arg10[%c0_i32_53, %c0_i32_54] : memref<512x1024xbf16, #tpu.memory_space<any>> -> memref<512x256xbf16, #tpu.memory_space<any>>
    %c0_i32_55 = arith.constant 0 : i32
    %c0_i32_56 = arith.constant 0 : i32
    %100 = tpu.memref_slice %arg14[%c0_i32_55, %c0_i32_56] : memref<512x1024xbf16, #tpu.memory_space<vmem>> -> memref<512x256xbf16, #tpu.memory_space<vmem>>
    %101 = tpu.memref_slice %arg16[%c0_i32_52] : memref<4x!tpu.dma_semaphore, #tpu.memory_space<semaphore_mem>> -> memref<1x!tpu.dma_semaphore, #tpu.memory_space<semaphore_mem>>
    %102 = tpu.memref_squeeze %101 : memref<1x!tpu.dma_semaphore, #tpu.memory_space<semaphore_mem>> -> memref<!tpu.dma_semaphore, #tpu.memory_space<semaphore_mem>>
    tpu.wait_dma2 semaphore(%102 : memref<!tpu.dma_semaphore, #tpu.memory_space<semaphore_mem>>) src(%99 : memref<512x256xbf16, #tpu.memory_space<any>>) dst(%100 : memref<512x256xbf16, #tpu.memory_space<vmem>>)
    %c0_57 = arith.constant 0 : index
    %c0_58 = arith.constant 0 : index
    %103 = vector.load %arg14[%c0_57, %c0_58] : memref<512x1024xbf16, #tpu.memory_space<vmem>>, vector<512x256xbf16>
    %cst_59 = arith.constant dense<0.000000e+00> : vector<8x256xf32>
    %104 = tpu.matmul %98, %103, %cst_59 {dimension_numbers = #tpu.dot_dimension_numbers<[1], [0], [0], [1], [0, 0, 1, 1], [], []>} : vector<8x512xbf16>, vector<512x256xbf16>, vector<8x256xf32> -> vector<8x256xf32>
    %c0_60 = arith.constant 0 : index
    %c0_61 = arith.constant 0 : index
    %105 = vector.load %arg11[%c0_60, %c0_61] : memref<1x1024xf32, #tpu.memory_space<vmem>>, vector<1x256xf32>
    %106 = vector.broadcast %105 : vector<1x256xf32> to vector<8x256xf32>
    %107 = arith.addf %104, %106 : vector<8x256xf32>
    %108 = arith.negf %107 : vector<8x256xf32>
    %109 = math.exp %108 : vector<8x256xf32>
    %cst_62 = arith.constant 1.000000e+00 : f32
    %110 = vector.broadcast %cst_62 : f32 to vector<8x256xf32>
    %111 = arith.addf %110, %109 : vector<8x256xf32>
    %112 = arith.divf %110, %111 : vector<8x256xf32>
    %c0_63 = arith.constant 0 : index
    %c0_64 = arith.constant 0 : index
    %113 = vector.load %arg12[%c0_63, %c0_64] : memref<8x1024xf32, #tpu.memory_space<vmem>>, vector<8x256xf32>
    tpu.vector_store %arg12[%c0_63, %c0_64], %112 {strides = array<i32>} : memref<8x1024xf32, #tpu.memory_space<vmem>>, vector<8x256xf32>,
    %c1_i32_65 = arith.constant 1 : i32
    %c0_i32_66 = arith.constant 0 : i32
    %c256_i32_67 = arith.constant 256 : i32
    %114 = tpu.memref_slice %arg10[%c0_i32_66, %c256_i32_67] : memref<512x1024xbf16, #tpu.memory_space<any>> -> memref<512x256xbf16, #tpu.memory_space<any>>
    %c0_i32_68 = arith.constant 0 : i32
    %c256_i32_69 = arith.constant 256 : i32
    %115 = tpu.memref_slice %arg14[%c0_i32_68, %c256_i32_69] : memref<512x1024xbf16, #tpu.memory_space<vmem>> -> memref<512x256xbf16, #tpu.memory_space<vmem>>
    %116 = tpu.memref_slice %arg16[%c1_i32_65] : memref<4x!tpu.dma_semaphore, #tpu.memory_space<semaphore_mem>> -> memref<1x!tpu.dma_semaphore, #tpu.memory_space<semaphore_mem>>
    %117 = tpu.memref_squeeze %116 : memref<1x!tpu.dma_semaphore, #tpu.memory_space<semaphore_mem>> -> memref<!tpu.dma_semaphore, #tpu.memory_space<semaphore_mem>>
    tpu.wait_dma2 semaphore(%117 : memref<!tpu.dma_semaphore, #tpu.memory_space<semaphore_mem>>) src(%114 : memref<512x256xbf16, #tpu.memory_space<any>>) dst(%115 : memref<512x256xbf16, #tpu.memory_space<vmem>>)
    %c0_70 = arith.constant 0 : index
    %c256 = arith.constant 256 : index
    %118 = vector.load %arg14[%c0_70, %c256] : memref<512x1024xbf16, #tpu.memory_space<vmem>>, vector<512x256xbf16>
    %cst_71 = arith.constant dense<0.000000e+00> : vector<8x256xf32>
    %119 = tpu.matmul %98, %118, %cst_71 {dimension_numbers = #tpu.dot_dimension_numbers<[1], [0], [0], [1], [0, 0, 1, 1], [], []>} : vector<8x512xbf16>, vector<512x256xbf16>, vector<8x256xf32> -> vector<8x256xf32>
    %c0_72 = arith.constant 0 : index
    %c256_73 = arith.constant 256 : index
    %120 = vector.load %arg11[%c0_72, %c256_73] : memref<1x1024xf32, #tpu.memory_space<vmem>>, vector<1x256xf32>
    %121 = vector.broadcast %120 : vector<1x256xf32> to vector<8x256xf32>
    %122 = arith.addf %119, %121 : vector<8x256xf32>
    %123 = arith.negf %122 : vector<8x256xf32>
    %124 = math.exp %123 : vector<8x256xf32>
    %cst_74 = arith.constant 1.000000e+00 : f32
    %125 = vector.broadcast %cst_74 : f32 to vector<8x256xf32>
    %126 = arith.addf %125, %124 : vector<8x256xf32>
    %127 = arith.divf %125, %126 : vector<8x256xf32>
    %c0_75 = arith.constant 0 : index
    %c256_76 = arith.constant 256 : index
    %128 = vector.load %arg12[%c0_75, %c256_76] : memref<8x1024xf32, #tpu.memory_space<vmem>>, vector<8x256xf32>
    tpu.vector_store %arg12[%c0_75, %c256_76], %127 {strides = array<i32>} : memref<8x1024xf32, #tpu.memory_space<vmem>>, vector<8x256xf32>,
    %c2_i32_77 = arith.constant 2 : i32
    %c0_i32_78 = arith.constant 0 : i32
    %c512_i32_79 = arith.constant 512 : i32
    %129 = tpu.memref_slice %arg10[%c0_i32_78, %c512_i32_79] : memref<512x1024xbf16, #tpu.memory_space<any>> -> memref<512x256xbf16, #tpu.memory_space<any>>
    %c0_i32_80 = arith.constant 0 : i32
    %c512_i32_81 = arith.constant 512 : i32
    %130 = tpu.memref_slice %arg14[%c0_i32_80, %c512_i32_81] : memref<512x1024xbf16, #tpu.memory_space<vmem>> -> memref<512x256xbf16, #tpu.memory_space<vmem>>
    %131 = tpu.memref_slice %arg16[%c2_i32_77] : memref<4x!tpu.dma_semaphore, #tpu.memory_space<semaphore_mem>> -> memref<1x!tpu.dma_semaphore, #tpu.memory_space<semaphore_mem>>
    %132 = tpu.memref_squeeze %131 : memref<1x!tpu.dma_semaphore, #tpu.memory_space<semaphore_mem>> -> memref<!tpu.dma_semaphore, #tpu.memory_space<semaphore_mem>>
    tpu.wait_dma2 semaphore(%132 : memref<!tpu.dma_semaphore, #tpu.memory_space<semaphore_mem>>) src(%129 : memref<512x256xbf16, #tpu.memory_space<any>>) dst(%130 : memref<512x256xbf16, #tpu.memory_space<vmem>>)
    %c0_82 = arith.constant 0 : index
    %c512 = arith.constant 512 : index
    %133 = vector.load %arg14[%c0_82, %c512] : memref<512x1024xbf16, #tpu.memory_space<vmem>>, vector<512x256xbf16>
    %cst_83 = arith.constant dense<0.000000e+00> : vector<8x256xf32>
    %134 = tpu.matmul %98, %133, %cst_83 {dimension_numbers = #tpu.dot_dimension_numbers<[1], [0], [0], [1], [0, 0, 1, 1], [], []>} : vector<8x512xbf16>, vector<512x256xbf16>, vector<8x256xf32> -> vector<8x256xf32>
    %c0_84 = arith.constant 0 : index
    %c512_85 = arith.constant 512 : index
    %135 = vector.load %arg11[%c0_84, %c512_85] : memref<1x1024xf32, #tpu.memory_space<vmem>>, vector<1x256xf32>
    %136 = vector.broadcast %135 : vector<1x256xf32> to vector<8x256xf32>
    %137 = arith.addf %134, %136 : vector<8x256xf32>
    %138 = arith.negf %137 : vector<8x256xf32>
    %139 = math.exp %138 : vector<8x256xf32>
    %cst_86 = arith.constant 1.000000e+00 : f32
    %140 = vector.broadcast %cst_86 : f32 to vector<8x256xf32>
    %141 = arith.addf %140, %139 : vector<8x256xf32>
    %142 = arith.divf %140, %141 : vector<8x256xf32>
    %c0_87 = arith.constant 0 : index
    %c512_88 = arith.constant 512 : index
    %143 = vector.load %arg12[%c0_87, %c512_88] : memref<8x1024xf32, #tpu.memory_space<vmem>>, vector<8x256xf32>
    tpu.vector_store %arg12[%c0_87, %c512_88], %142 {strides = array<i32>} : memref<8x1024xf32, #tpu.memory_space<vmem>>, vector<8x256xf32>,
    %c3_i32_89 = arith.constant 3 : i32
    %c0_i32_90 = arith.constant 0 : i32
    %c768_i32_91 = arith.constant 768 : i32
    %144 = tpu.memref_slice %arg10[%c0_i32_90, %c768_i32_91] : memref<512x1024xbf16, #tpu.memory_space<any>> -> memref<512x256xbf16, #tpu.memory_space<any>>
    %c0_i32_92 = arith.constant 0 : i32
    %c768_i32_93 = arith.constant 768 : i32
    %145 = tpu.memref_slice %arg14[%c0_i32_92, %c768_i32_93] : memref<512x1024xbf16, #tpu.memory_space<vmem>> -> memref<512x256xbf16, #tpu.memory_space<vmem>>
    %146 = tpu.memref_slice %arg16[%c3_i32_89] : memref<4x!tpu.dma_semaphore, #tpu.memory_space<semaphore_mem>> -> memref<1x!tpu.dma_semaphore, #tpu.memory_space<semaphore_mem>>
    %147 = tpu.memref_squeeze %146 : memref<1x!tpu.dma_semaphore, #tpu.memory_space<semaphore_mem>> -> memref<!tpu.dma_semaphore, #tpu.memory_space<semaphore_mem>>
    tpu.wait_dma2 semaphore(%147 : memref<!tpu.dma_semaphore, #tpu.memory_space<semaphore_mem>>) src(%144 : memref<512x256xbf16, #tpu.memory_space<any>>) dst(%145 : memref<512x256xbf16, #tpu.memory_space<vmem>>)
    %c0_94 = arith.constant 0 : index
    %c768 = arith.constant 768 : index
    %148 = vector.load %arg14[%c0_94, %c768] : memref<512x1024xbf16, #tpu.memory_space<vmem>>, vector<512x256xbf16>
    %cst_95 = arith.constant dense<0.000000e+00> : vector<8x256xf32>
    %149 = tpu.matmul %98, %148, %cst_95 {dimension_numbers = #tpu.dot_dimension_numbers<[1], [0], [0], [1], [0, 0, 1, 1], [], []>} : vector<8x512xbf16>, vector<512x256xbf16>, vector<8x256xf32> -> vector<8x256xf32>
    %c0_96 = arith.constant 0 : index
    %c768_97 = arith.constant 768 : index
    %150 = vector.load %arg11[%c0_96, %c768_97] : memref<1x1024xf32, #tpu.memory_space<vmem>>, vector<1x256xf32>
    %151 = vector.broadcast %150 : vector<1x256xf32> to vector<8x256xf32>
    %152 = arith.addf %149, %151 : vector<8x256xf32>
    %153 = arith.negf %152 : vector<8x256xf32>
    %154 = math.exp %153 : vector<8x256xf32>
    %cst_98 = arith.constant 1.000000e+00 : f32
    %155 = vector.broadcast %cst_98 : f32 to vector<8x256xf32>
    %156 = arith.addf %155, %154 : vector<8x256xf32>
    %157 = arith.divf %155, %156 : vector<8x256xf32>
    %c0_99 = arith.constant 0 : index
    %c768_100 = arith.constant 768 : index
    %158 = vector.load %arg12[%c0_99, %c768_100] : memref<8x1024xf32, #tpu.memory_space<vmem>>, vector<8x256xf32>
    tpu.vector_store %arg12[%c0_99, %c768_100], %157 {strides = array<i32>} : memref<8x1024xf32, #tpu.memory_space<vmem>>, vector<8x256xf32>,
    return
  }
}

</mosaic_0001>

<llo_original>
// kernel: tpu_custom_call.1
$region0: #{tpu_custom_call.1}
  #allocation0 [shape = 'u32[]', space=smem, size = 0x4, offset = 0x4, fixed_abs, tag = 'smem constant byte address 0x4 - core index']
  #allocation1 [shape = 'u32[144,128]{1,0:T(1,128)}', space=vmem, size = 0x12000, scoped, tag = 'internal scratch']
  #allocation2 [shape = 'bf16[256,512]{1,0:T(16,128)(2,1)}', space=vmem, size = 0x40000, scoped, tag = 'scratch operand']
  #allocation3 [shape = 'bf16[512,1024]{1,0:T(16,128)(2,1)}', space=vmem, size = 0x100000, scoped, tag = 'scratch operand']
  #allocation4 [shape = 's32[1]{0}', space=sflag, size = 0x4, scoped, tag = 'scratch operand']
  #allocation5 [shape = 's32[4]{0}', space=sflag, size = 0x10, scoped, tag = 'scratch operand']
  #allocation16 [shape = 's32[]', space=sflag, size = 0x4, offset = 0, fixed_abs, tag = 'sflag constant byte address 0x0 - dummy sync flag']
  #allocation18 [shape = 's32[]', space=sflag, size = 0x4, offset = 0, fixed_abs, tag = 'sflag constant byte address 0x0 - dummy sync flag']
  #allocation20 [shape = 's32[]', space=sflag, size = 0x4, offset = 0, fixed_abs, tag = 'sflag constant byte address 0x0 - dummy sync flag']
  #allocation22 [shape = 's32[]', space=sflag, size = 0x4, offset = 0, fixed_abs, tag = 'sflag constant byte address 0x0 - dummy sync flag']
  #allocation24 [shape = 's32[]', space=sflag, size = 0x4, offset = 0, fixed_abs, tag = 'sflag constant byte address 0x0 - dummy sync flag']
  %s0 = inlined_call_operand.hbm [shape: f32[8,64], index: 0, kind: input, shape index: {}]
  %s1 = inlined_call_operand.hbm [shape: bf16[64,256], index: 1, kind: input, shape index: {}]
  %s2 = inlined_call_operand.vmem [shape: f32[1,256], index: 2, kind: input, shape index: {}]
  %s3 = inlined_call_operand.hbm [shape: f32[1,256], index: 3, kind: input, shape index: {}]
  %s4 = inlined_call_operand.hbm [shape: bf16[256,256], index: 4, kind: input, shape index: {}]
  %s5 = inlined_call_operand.hbm [shape: f32[1,256], index: 5, kind: input, shape index: {}]
  %s6 = inlined_call_operand.vmem [shape: f32[1,256], index: 6, kind: input, shape index: {}]
  %s7 = inlined_call_operand.hbm [shape: bf16[256,512], index: 7, kind: input, shape index: {}]
  %s8 = inlined_call_operand.vmem [shape: f32[1,512], index: 8, kind: input, shape index: {}]
  %s9 = inlined_call_operand.vmem [shape: f32[1,512], index: 9, kind: input, shape index: {}]
  %s10 = inlined_call_operand.hbm [shape: bf16[512,1024], index: 10, kind: input, shape index: {}]
  %s11 = inlined_call_operand.vmem [shape: f32[1,1024], index: 11, kind: input, shape index: {}]
  %s12 = inlined_call_operand.hbm [shape: f32[8,1024], index: 12, kind: output, shape index: {}]
  %s13 = sld [smem:[#allocation0]]
  $region70: #{tpu_custom_call.1} parent=0
    _
  %s15 = ssub.s32 1, %s13
  %s16 = scalar_select 0, %s15, %s13
  $region1: #{tpu_custom_call.1} parent=0
    #allocation6 [shape = 'u8[4096]{0}', space=vmem, size = 0x1000, scoped, tag = 'input window, operand 0, single buffered']
    #allocation7 [shape = 's32[1]{0}', space=sflag, size = 0x4, scoped, tag = 'scoped memory for tpu_custom_call.1']
    #allocation8 [shape = 's32[1]{0}', space=sflag, size = 0x4, scoped, tag = 'scoped memory for tpu_custom_call.1']
    #allocation9 [shape = 'u8[32768]{0}', space=vmem, size = 0x8000, scoped, tag = 'input window, operand 1, single buffered']
    #allocation10 [shape = 's32[1]{0}', space=sflag, size = 0x4, scoped, tag = 'scoped memory for tpu_custom_call.1']
    #allocation11 [shape = 'u8[1024]{0}', space=vmem, size = 0x400, scoped, tag = 'input window, operand 3, single buffered']
    #allocation12 [shape = 'u8[131072]{0}', space=vmem, size = 0x20000, scoped, tag = 'input window, operand 4, single buffered']
    #allocation13 [shape = 's32[1]{0}', space=sflag, size = 0x4, scoped, tag = 'scoped memory for tpu_custom_call.1']
    #allocation14 [shape = 'u8[1024]{0}', space=vmem, size = 0x400, scoped, tag = 'input window, operand 5, single buffered']
    #allocation15 [shape = 'u8[32768]{0}', space=vmem, size = 0x8000, scoped, tag = 'output window, operand 0, single buffered']
    #allocation17 [shape = 'u32[9]{0}', space=smem, size = 0x24, scoped, tag = 'DMA stride descriptor']
    #allocation19 [shape = 'u32[9]{0}', space=smem, size = 0x24, scoped, tag = 'DMA stride descriptor']
    #allocation21 [shape = 'u32[9]{0}', space=smem, size = 0x24, scoped, tag = 'DMA stride descriptor']
    #allocation23 [shape = 'u32[9]{0}', space=smem, size = 0x24, scoped, tag = 'DMA stride descriptor']
    #allocation25 [shape = 'u32[9]{0}', space=smem, size = 0x24, scoped, tag = 'DMA stride descriptor']
    %17 = vsyncpa [#allocation7], 0
    %18 = vsyncpa [#allocation10], 0
    %19 = vsyncpa [#allocation13], 0
    %20 = vsyncpa [#allocation8], 0
    // Predicated region
    $region2: #{tpu_custom_call.1} parent=1 // pred_check
      _
    $region3: #{tpu_custom_call.1} parent=1 // pred_check_branch
      %22 = sbr.rel (0) target = $region5
    $region4: #{tpu_custom_call.1} parent=1 // pred_region
      %s24 = ssub.s32 128, 128
      %25 = vsyncadd [#allocation7], %s24
      %s27 = sshll.u32 [#allocation6], 4
      %s28 = int_to_ptr.vmem [resolvable:$true] %s27
      %30 = dma.hbm_to_vmem [thread:$0]  %s0, 128, %s28, [#allocation7]
    $region5: #{tpu_custom_call.1} parent=1 // pred_fallthru
      _
    // Predicated region
    $region6: #{tpu_custom_call.1} parent=1 // pred_check
      _
    $region7: #{tpu_custom_call.1} parent=1 // pred_check_branch
      %32 = sbr.rel (0) target = $region9
    $region8: #{tpu_custom_call.1} parent=1 // pred_region
      %s34 = ssub.s32 1024, 1024
      %35 = vsyncadd [#allocation10], %s34
      %s36 = sshll.u32 [#allocation9], 4
      %s37 = int_to_ptr.vmem [resolvable:$true] %s36
      %42 = dma.hbm_to_vmem [thread:$0]  %s1, 1024, %s37, [#allocation10], 128, 128, 8
    $region9: #{tpu_custom_call.1} parent=1 // pred_fallthru
      _
    // Predicated region
    $region10: #{tpu_custom_call.1} parent=1 // pred_check
      _
    $region11: #{tpu_custom_call.1} parent=1 // pred_check_branch
      %44 = sbr.rel (0) target = $region13
    $region12: #{tpu_custom_call.1} parent=1 // pred_region
      _
    $region13: #{tpu_custom_call.1} parent=1 // pred_fallthru
      _
    // Predicated region
    $region14: #{tpu_custom_call.1} parent=1 // pred_check
      _
    $region15: #{tpu_custom_call.1} parent=1 // pred_check_branch
      %46 = sbr.rel (0) target = $region17
    $region16: #{tpu_custom_call.1} parent=1 // pred_region
      %s48 = ssub.s32 32, 32
      %49 = vsyncadd [#allocation10], %s48
      %s51 = sshll.u32 [#allocation11], 4
      %s52 = int_to_ptr.vmem [resolvable:$true] %s51
      %54 = dma.hbm_to_vmem [thread:$0]  %s3, 32, %s52, [#allocation10]
    $region17: #{tpu_custom_call.1} parent=1 // pred_fallthru
      _
    // Predicated region
    $region18: #{tpu_custom_call.1} parent=1 // pred_check
      _
    $region19: #{tpu_custom_call.1} parent=1 // pred_check_branch
      %56 = sbr.rel (0) target = $region21
    $region20: #{tpu_custom_call.1} parent=1 // pred_region
      %s58 = ssub.s32 4096, 4096
      %59 = vsyncadd [#allocation13], %s58
      %s60 = sshll.u32 [#allocation12], 4
      %s61 = int_to_ptr.vmem [resolvable:$true] %s60
      %66 = dma.hbm_to_vmem [thread:$0]  %s4, 4096, %s61, [#allocation13], 128, 128, 8
    $region21: #{tpu_custom_call.1} parent=1 // pred_fallthru
      _
    // Predicated region
    $region22: #{tpu_custom_call.1} parent=1 // pred_check
      _
    $region23: #{tpu_custom_call.1} parent=1 // pred_check_branch
      %68 = sbr.rel (0) target = $region25
    $region24: #{tpu_custom_call.1} parent=1 // pred_region
      %s70 = ssub.s32 32, 32
      %71 = vsyncadd [#allocation13], %s70
      %s73 = sshll.u32 [#allocation14], 4
      %s74 = int_to_ptr.vmem [resolvable:$true] %s73
      %76 = dma.hbm_to_vmem [thread:$0]  %s5, 32, %s74, [#allocation13]
    $region25: #{tpu_custom_call.1} parent=1 // pred_fallthru
      _
    // Predicated region
    $region26: #{tpu_custom_call.1} parent=1 // pred_check
      _
    $region27: #{tpu_custom_call.1} parent=1 // pred_check_branch
      %78 = sbr.rel (0) target = $region29
    $region28: #{tpu_custom_call.1} parent=1 // pred_region
      _
    $region29: #{tpu_custom_call.1} parent=1 // pred_fallthru
      _
    // Predicated region
    $region30: #{tpu_custom_call.1} parent=1 // pred_check
      _
    $region31: #{tpu_custom_call.1} parent=1 // pred_check_branch
      %80 = sbr.rel (0) target = $region33
    $region32: #{tpu_custom_call.1} parent=1 // pred_region
      _
    $region33: #{tpu_custom_call.1} parent=1 // pred_fallthru
      _
    // Predicated region
    $region34: #{tpu_custom_call.1} parent=1 // pred_check
      _
    $region35: #{tpu_custom_call.1} parent=1 // pred_check_branch
      %82 = sbr.rel (0) target = $region37
    $region36: #{tpu_custom_call.1} parent=1 // pred_region
      _
    $region37: #{tpu_custom_call.1} parent=1 // pred_fallthru
      _
    // Predicated region
    $region38: #{tpu_custom_call.1} parent=1 // pred_check
      _
    $region39: #{tpu_custom_call.1} parent=1 // pred_check_branch
      %84 = sbr.rel (0) target = $region41
    $region40: #{tpu_custom_call.1} parent=1 // pred_region
      _
    $region41: #{tpu_custom_call.1} parent=1 // pred_fallthru
      _
    // Predicated region
    $region42: #{tpu_custom_call.1} parent=1 // pred_check
      _
    $region43: #{tpu_custom_call.1} parent=1 // pred_check_branch
      %86 = sbr.rel (0) target = $region45
    $region44: #{tpu_custom_call.1} parent=1 // pred_region
      %87 = dma.done [#allocation7], 128
    $region45: #{tpu_custom_call.1} parent=1 // pred_fallthru
      _
    // Predicated region
    $region46: #{tpu_custom_call.1} parent=1 // pred_check
      _
    $region47: #{tpu_custom_call.1} parent=1 // pred_check_branch
      %89 = sbr.rel (0) target = $region49
    $region48: #{tpu_custom_call.1} parent=1 // pred_region
      %90 = dma.done [#allocation10], 1024
    $region49: #{tpu_custom_call.1} parent=1 // pred_fallthru
      _
    // Predicated region
    $region50: #{tpu_custom_call.1} parent=1 // pred_check
      _
    $region51: #{tpu_custom_call.1} parent=1 // pred_check_branch
      %92 = sbr.rel (0) target = $region53
    $region52: #{tpu_custom_call.1} parent=1 // pred_region
      %93 = dma.done [#allocation10], 32
    $region53: #{tpu_custom_call.1} parent=1 // pred_fallthru
      _
    // Predicated region
    $region54: #{tpu_custom_call.1} parent=1 // pred_check
      _
    $region55: #{tpu_custom_call.1} parent=1 // pred_check_branch
      %95 = sbr.rel (0) target = $region57
    $region56: #{tpu_custom_call.1} parent=1 // pred_region
      %96 = dma.done [#allocation13], 4096
    $region57: #{tpu_custom_call.1} parent=1 // pred_fallthru
      _
    // Predicated region
    $region58: #{tpu_custom_call.1} parent=1 // pred_check
      _
    $region59: #{tpu_custom_call.1} parent=1 // pred_check_branch
      %98 = sbr.rel (0) target = $region61
    $region60: #{tpu_custom_call.1} parent=1 // pred_region
      %99 = dma.done [#allocation13], 32
    $region61: #{tpu_custom_call.1} parent=1 // pred_fallthru
      _
    %s102 = sshll.u32 1, 14
    %s103 = sxor.u32 4294967295, %s102
    %s105 = sld [smem:[#allocation0]]
    %s106 = sadd.s32 2, %s105
    %s108 = sshll.u32 7, 26
    %s109 = sxor.u32 4294967295, %s108
    %s110 = sand.u32 0, %s109
    %s111 = sshll.u32 %s106, 26
    %s112 = sor.u32 %s110, %s111
    %s113 = sshll.u32 [#allocation2], 4
    %s114 = int_to_ptr.vmem [resolvable:$true] %s113
    %117 = sst [smem:[#allocation17]] 512
    %s118 = scalar_lea.smem [#allocation17], 1
    %119 = sst [smem:[%s118]] 512
    %s120 = scalar_lea.smem [#allocation17], 2
    %121 = sst [smem:[%s120]] 4
    %s122 = scalar_lea.smem [#allocation17], 3
    %123 = sst [smem:[%s122]] 64
    %s124 = scalar_lea.smem [#allocation17], 4
    %125 = sst [smem:[%s124]] 128
    %s126 = scalar_lea.smem [#allocation17], 5
    %127 = sst [smem:[%s126]] 2
    %s128 = scalar_lea.smem [#allocation17], 6
    %129 = sst [smem:[%s128]] 256
    %s130 = scalar_lea.smem [#allocation17], 7
    %131 = sst [smem:[%s130]] 64
    %s132 = scalar_lea.smem [#allocation17], 8
    %133 = sst [smem:[%s132]] 4
    %135 = dma.general %s7, 8192, %s114, [#allocation4], [#allocation16], [#allocation17], %s112, 0
    %s137 = sshll.u32 1, 14
    %s138 = sxor.u32 4294967295, %s137
    %s140 = sadd.s32 2, %s105
    %s142 = sshll.u32 7, 26
    %s143 = sxor.u32 4294967295, %s142
    %s144 = sand.u32 0, %s143
    %s145 = sshll.u32 %s140, 26
    %s146 = sor.u32 %s144, %s145
    %s147 = sshll.u32 [#allocation3], 4
    %s148 = int_to_ptr.vmem [resolvable:$true] %s147
    %151 = sst [smem:[#allocation19]] 1024
    %s152 = scalar_lea.smem [#allocation19], 1
    %153 = sst [smem:[%s152]] 1024
    %s154 = scalar_lea.smem [#allocation19], 2
    %155 = sst [smem:[%s154]] 2
    %s156 = scalar_lea.smem [#allocation19], 3
    %157 = sst [smem:[%s156]] 64
    %s158 = scalar_lea.smem [#allocation19], 4
    %159 = sst [smem:[%s158]] 128
    %s160 = scalar_lea.smem [#allocation19], 5
    %161 = sst [smem:[%s160]] 2
    %s162 = scalar_lea.smem [#allocation19], 6
    %163 = sst [smem:[%s162]] 512
    %s164 = scalar_lea.smem [#allocation19], 7
    %165 = sst [smem:[%s164]] 64
    %s166 = scalar_lea.smem [#allocation19], 8
    %167 = sst [smem:[%s166]] 4
    %169 = dma.general %s10, 8192, %s148, [#allocation5], [#allocation18], [#allocation19], %s146, 0
    %s170 = scalar_lea.hbm %s10, 128
    %s171 = scalar_lea.vmem [#allocation3], 16
    %s172 = scalar_lea.sflag [#allocation5], 1
    %s174 = sshll.u32 1, 14
    %s175 = sxor.u32 4294967295, %s174
    %s177 = sadd.s32 2, %s105
    %s179 = sshll.u32 7, 26
    %s180 = sxor.u32 4294967295, %s179
    %s181 = sand.u32 0, %s180
    %s182 = sshll.u32 %s177, 26
    %s183 = sor.u32 %s181, %s182
    %s184 = sshll.u32 %s171, 4
    %s185 = int_to_ptr.vmem [resolvable:$true] %s184
    %188 = sst [smem:[#allocation21]] 1024
    %s189 = scalar_lea.smem [#allocation21], 1
    %190 = sst [smem:[%s189]] 1024
    %s191 = scalar_lea.smem [#allocation21], 2
    %192 = sst [smem:[%s191]] 2
    %s193 = scalar_lea.smem [#allocation21], 3
    %194 = sst [smem:[%s193]] 64
    %s195 = scalar_lea.smem [#allocation21], 4
    %196 = sst [smem:[%s195]] 128
    %s197 = scalar_lea.smem [#allocation21], 5
    %198 = sst [smem:[%s197]] 2
    %s199 = scalar_lea.smem [#allocation21], 6
    %200 = sst [smem:[%s199]] 512
    %s201 = scalar_lea.smem [#allocation21], 7
    %202 = sst [smem:[%s201]] 64
    %s203 = scalar_lea.smem [#allocation21], 8
    %204 = sst [smem:[%s203]] 4
    %206 = dma.general %s170, 8192, %s185, %s172, [#allocation20], [#allocation21], %s183, 0
    %s207 = scalar_lea.hbm %s10, 256
    %s208 = scalar_lea.vmem [#allocation3], 32
    %s209 = scalar_lea.sflag [#allocation5], 2
    %s211 = sshll.u32 1, 14
    %s212 = sxor.u32 4294967295, %s211
    %s214 = sadd.s32 2, %s105
    %s216 = sshll.u32 7, 26
    %s217 = sxor.u32 4294967295, %s216
    %s218 = sand.u32 0, %s217
    %s219 = sshll.u32 %s214, 26
    %s220 = sor.u32 %s218, %s219
    %s221 = sshll.u32 %s208, 4
    %s222 = int_to_ptr.vmem [resolvable:$true] %s221
    %225 = sst [smem:[#allocation23]] 1024
    %s226 = scalar_lea.smem [#allocation23], 1
    %227 = sst [smem:[%s226]] 1024
    %s228 = scalar_lea.smem [#allocation23], 2
    %229 = sst [smem:[%s228]] 2
    %s230 = scalar_lea.smem [#allocation23], 3
    %231 = sst [smem:[%s230]] 64
    %s232 = scalar_lea.smem [#allocation23], 4
    %233 = sst [smem:[%s232]] 128
    %s234 = scalar_lea.smem [#allocation23], 5
    %235 = sst [smem:[%s234]] 2
    %s236 = scalar_lea.smem [#allocation23], 6
    %237 = sst [smem:[%s236]] 512
    %s238 = scalar_lea.smem [#allocation23], 7
    %239 = sst [smem:[%s238]] 64
    %s240 = scalar_lea.smem [#allocation23], 8
    %241 = sst [smem:[%s240]] 4
    %243 = dma.general %s207, 8192, %s222, %s209, [#allocation22], [#allocation23], %s220, 0
    %s244 = scalar_lea.hbm %s10, 384
    %s245 = scalar_lea.vmem [#allocation3], 48
    %s246 = scalar_lea.sflag [#allocation5], 3
    %s248 = sshll.u32 1, 14
    %s249 = sxor.u32 4294967295, %s248
    %s251 = sadd.s32 2, %s105
    %s253 = sshll.u32 7, 26
    %s254 = sxor.u32 4294967295, %s253
    %s255 = sand.u32 0, %s254
    %s256 = sshll.u32 %s251, 26
    %s257 = sor.u32 %s255, %s256
    %s258 = sshll.u32 %s245, 4
    %s259 = int_to_ptr.vmem [resolvable:$true] %s258
    %262 = sst [smem:[#allocation25]] 1024
    %s263 = scalar_lea.smem [#allocation25], 1
    %264 = sst [smem:[%s263]] 1024
    %s265 = scalar_lea.smem [#allocation25], 2
    %266 = sst [smem:[%s265]] 2
    %s267 = scalar_lea.smem [#allocation25], 3
    %268 = sst [smem:[%s267]] 64
    %s269 = scalar_lea.smem [#allocation25], 4
    %270 = sst [smem:[%s269]] 128
    %s271 = scalar_lea.smem [#allocation25], 5
    %272 = sst [smem:[%s271]] 2
    %s273 = scalar_lea.smem [#allocation25], 6
    %274 = sst [smem:[%s273]] 512
    %s275 = scalar_lea.smem [#allocation25], 7
    %276 = sst [smem:[%s275]] 64
    %s277 = scalar_lea.smem [#allocation25], 8
    %278 = sst [smem:[%s277]] 4
    %280 = dma.general %s244, 8192, %s259, %s246, [#allocation24], [#allocation25], %s257, 0
    %v281 = vld [vmem:[#allocation6] sm:$0xff]
    %v282 = vpack.c.bf16 %v281, %v281
    %v283 = vld [vmem:[#allocation9] sm:$0xff]
    %v284 = vld [vmem:[#allocation9 + $0x8] sm:$0xff]
    %v285 = vld [vmem:[#allocation9 + $0x10] sm:$0xff]
    %v286 = vld [vmem:[#allocation9 + $0x18] sm:$0xff]
    %v287 = vld [vmem:[#allocation9 + $0x20] sm:$0xff]
    %v288 = vld [vmem:[#allocation9 + $0x28] sm:$0xff]
    %v289 = vld [vmem:[#allocation9 + $0x30] sm:$0xff]
    %v290 = vld [vmem:[#allocation9 + $0x38] sm:$0xff]
    %v299 = vunpack.c.l.b16 %v283
    %v300 = vunpack.c.h.b16 %v283
    %v301 = vunpack.c.l.b16 %v284
    %v302 = vunpack.c.h.b16 %v284
    %v303 = vunpack.c.l.b16 %v285
    %v304 = vunpack.c.h.b16 %v285
    %v305 = vunpack.c.l.b16 %v286
    %v306 = vunpack.c.h.b16 %v286
    %v307 = vunpack.c.l.b16 %v287
    %v308 = vunpack.c.h.b16 %v287
    %v309 = vunpack.c.l.b16 %v288
    %v310 = vunpack.c.h.b16 %v288
    %v311 = vunpack.c.l.b16 %v289
    %v312 = vunpack.c.h.b16 %v289
    %v313 = vunpack.c.l.b16 %v290
    %v314 = vunpack.c.h.b16 %v290
    %v315 = vpack.c.b16 %v301, %v299
    %v316 = vpack.c.b16 %v302, %v300
    %v317 = vpack.c.b16 %v305, %v303
    %v318 = vpack.c.b16 %v306, %v304
    %v319 = vpack.c.b16 %v309, %v307
    %v320 = vpack.c.b16 %v310, %v308
    %v321 = vpack.c.b16 %v313, %v311
    %v322 = vpack.c.b16 %v314, %v312
    %vm331 = vcmask 523264
    %v333 = vsel %vm331, %v282, 0
    %335 = vmatprep.subr.bf16.mxu0 %v316
    %336 = vmatpush1.bf16.msra.mxu0 %v315
    %337 = vmatprep.subr.bf16.mxu0 %v318
    %338 = vmatpush1.bf16.msra.mxu0 %v317
    %339 = vmatprep.subr.bf16.mxu0 %v320
    %340 = vmatpush1.bf16.msra.mxu0 %v319
    %341 = vmatprep.subr.bf16.mxu0 %v322
    %342 = vmatpush1.bf16.msra.mxu0 %v321
    %343 = vmatprep.subr.bf16.mxu0 0
    %344 = vmatpush1.bf16.msra.mxu0 0
    %345 = vmatprep.subr.bf16.mxu0 0
    %346 = vmatpush1.bf16.msra.mxu0 0
    %347 = vmatprep.subr.bf16.mxu0 0
    %348 = vmatpush1.bf16.msra.mxu0 0
    %349 = vmatprep.subr.bf16.mxu0 0
    %350 = vmatpush1.bf16.msra.mxu0 0
    %351 = vmatprep.subr.bf16.mxu0 0
    %352 = vmatpush1.bf16.msra.mxu0 0
    %353 = vmatprep.subr.bf16.mxu0 0
    %354 = vmatpush1.bf16.msra.mxu0 0
    %355 = vmatprep.subr.bf16.mxu0 0
    %356 = vmatpush1.bf16.msra.mxu0 0
    %357 = vmatprep.subr.bf16.mxu0 0
    %358 = vmatpush1.bf16.msra.mxu0 0
    %359 = vmatprep.subr.bf16.mxu0 0
    %360 = vmatpush1.bf16.msra.mxu0 0
    %361 = vmatprep.subr.bf16.mxu0 0
    %362 = vmatpush1.bf16.msra.mxu0 0
    %363 = vmatprep.subr.bf16.mxu0 0
    %364 = vmatpush1.bf16.msra.mxu0 0
    %365 = vmatprep.subr.bf16.mxu0 0
    %366 = vmatpush1.bf16.msra.mxu0 0
    %367 = vmatprep.mubr.bf16.mxu0 0
    %368 = vmatmul.mubr.bf16.gmra.mrb[0].mxu0 %v333
    %v369 = vpop.f32.mrb[0].mxu0
    %v370 = vadd.f32 0.0, %v369
    %v371 = vpop.f32.mrb[0].mxu0
    %v372 = vadd.f32 0.0, %v371
    %v373 = vpop.f32.mrb[0].mxu0
    %v374 = vpop.f32.mrb[0].mxu0
    %375 = vdwg.mxu0
    %v376 = vld [vmem:[%s2] sm:$0x3]
    %v377 = vld [vmem:[#allocation11] sm:$0x3]
    %v378 = vrot.slane %v370, 4
    %v379 = vadd.f32 %v370, %v378
    %v380 = vrot.slane %v379, 2
    %v381 = vadd.f32 %v379, %v380
    %v382 = vrot.slane %v381, 1
    %v383 = vadd.f32 %v381, %v382
    %v384 = vrot.slane %v372, 4
    %v385 = vadd.f32 %v372, %v384
    %v386 = vrot.slane %v385, 2
    %v387 = vadd.f32 %v385, %v386
    %v388 = vrot.slane %v387, 1
    %v389 = vadd.f32 %v387, %v388
    %v390 = vrcp.pop 8.0
    %v391 = vmul.f32 %v383, %v390
    %v392 = vmul.f32 %v389, %v390
    %v393 = vsub.f32 %v370, %v391
    %v394 = vsub.f32 %v372, %v392
    %v395 = vmul.f32 %v393, %v393
    %v396 = vmul.f32 %v394, %v394
    %v397 = vrot.slane %v395, 4
    %v398 = vadd.f32 %v395, %v397
    %v399 = vrot.slane %v398, 2
    %v400 = vadd.f32 %v398, %v399
    %v401 = vrot.slane %v400, 1
    %v402 = vadd.f32 %v400, %v401
    %v403 = vrot.slane %v396, 4
    %v404 = vadd.f32 %v396, %v403
    %v405 = vrot.slane %v404, 2
    %v406 = vadd.f32 %v404, %v405
    %v407 = vrot.slane %v406, 1
    %v408 = vadd.f32 %v406, %v407
    %v409 = vmul.f32 %v402, %v390
    %v410 = vmul.f32 %v408, %v390
    %v411 = vadd.f32 %v409, 1e-05
    %v412 = vadd.f32 %v410, 1e-05
    %v413 = vrsqrt.pop %v411
    %v414 = vrsqrt.pop %v412
    %v417 = vcombine.low %v413, %v414
    %v419 = vunpack.c.l.s4 1966171168
    %v420 = vunpack.c.0.s8 %v419
    %v421 = vlaneseq
    %v422 = vshrl.u32 %v421, 7
    %v423 = vsub.s32 %v420, %v422
    %v424 = vrot.slane %v417, %v423
    %v426 = vunpack.c.l.s4 1966171168
    %v427 = vunpack.c.0.s8 %v426
    %v428 = vlaneseq
    %v429 = vshrl.u32 %v428, 7
    %v430 = vsub.s32 %v427, %v429
    %v431 = vrot.slane %v424, %v430
    %v433 = vmul.f32 %v376, %v431
    %v435 = vlaneseq
    %v436 = vshrl.u32 %v435, 7
    %v437 = vsub.s32 0, %v436
    %v438 = vrot.slane %v433, %v437
    %v439 = vlaneseq
    %v440 = vshrl.u32 %v439, 7
    %v441 = vsub.s32 1, %v440
    %v442 = vrot.slane %v433, %v441
    %v445 = vmul.f32 %v393, %v438
    %v446 = vmul.f32 %v394, %v442
    %v448 = vlaneseq
    %v449 = vshrl.u32 %v448, 7
    %v450 = vsub.s32 0, %v449
    %v451 = vrot.slane %v377, %v450
    %v452 = vlaneseq
    %v453 = vshrl.u32 %v452, 7
    %v454 = vsub.s32 1, %v453
    %v455 = vrot.slane %v377, %v454
    %v458 = vadd.f32 %v445, %v451
    %v459 = vadd.f32 %v446, %v455
    %v460 = vmul.f32 %v458, 0.01
    %v461 = vmul.f32 %v459, 0.01
    %v462 = vmax.f32 %v458, %v460
    %v463 = vmax.f32 %v459, %v461
    %v464 = vpack.c.bf16 %v462, %v462
    %v465 = vpack.c.bf16 %v463, %v463
    %v466 = vld [vmem:[#allocation12] sm:$0xff]
    %v467 = vld [vmem:[#allocation12 + $0x8] sm:$0xff]
    %v468 = vld [vmem:[#allocation12 + $0x10] sm:$0xff]
    %v469 = vld [vmem:[#allocation12 + $0x18] sm:$0xff]
    %v470 = vld [vmem:[#allocation12 + $0x20] sm:$0xff]
    %v471 = vld [vmem:[#allocation12 + $0x28] sm:$0xff]
    %v472 = vld [vmem:[#allocation12 + $0x30] sm:$0xff]
    %v473 = vld [vmem:[#allocation12 + $0x38] sm:$0xff]
    %v474 = vld [vmem:[#allocation12 + $0x40] sm:$0xff]
    %v475 = vld [vmem:[#allocation12 + $0x48] sm:$0xff]
    %v476 = vld [vmem:[#allocation12 + $0x50] sm:$0xff]
    %v477 = vld [vmem:[#allocation12 + $0x58] sm:$0xff]
    %v478 = vld [vmem:[#allocation12 + $0x60] sm:$0xff]
    %v479 = vld [vmem:[#allocation12 + $0x68] sm:$0xff]
    %v480 = vld [vmem:[#allocation12 + $0x70] sm:$0xff]
    %v481 = vld [vmem:[#allocation12 + $0x78] sm:$0xff]
    %v482 = vld [vmem:[#allocation12 + $0x80] sm:$0xff]
    %v483 = vld [vmem:[#allocation12 + $0x88] sm:$0xff]
    %v484 = vld [vmem:[#allocation12 + $0x90] sm:$0xff]
    %v485 = vld [vmem:[#allocation12 + $0x98] sm:$0xff]
    %v486 = vld [vmem:[#allocation12 + $0xa0] sm:$0xff]
    %v487 = vld [vmem:[#allocation12 + $0xa8] sm:$0xff]
    %v488 = vld [vmem:[#allocation12 + $0xb0] sm:$0xff]
    %v489 = vld [vmem:[#allocation12 + $0xb8] sm:$0xff]
    %v490 = vld [vmem:[#allocation12 + $0xc0] sm:$0xff]
    %v491 = vld [vmem:[#allocation12 + $0xc8] sm:$0xff]
    %v492 = vld [vmem:[#allocation12 + $0xd0] sm:$0xff]
    %v493 = vld [vmem:[#allocation12 + $0xd8] sm:$0xff]
    %v494 = vld [vmem:[#allocation12 + $0xe0] sm:$0xff]
    %v495 = vld [vmem:[#allocation12 + $0xe8] sm:$0xff]
    %v496 = vld [vmem:[#allocation12 + $0xf0] sm:$0xff]
    %v497 = vld [vmem:[#allocation12 + $0xf8] sm:$0xff]
    %v530 = vunpack.c.l.b16 %v466
    %v531 = vunpack.c.h.b16 %v466
    %v532 = vunpack.c.l.b16 %v467
    %v533 = vunpack.c.h.b16 %v467
    %v534 = vunpack.c.l.b16 %v468
    %v535 = vunpack.c.h.b16 %v468
    %v536 = vunpack.c.l.b16 %v469
    %v537 = vunpack.c.h.b16 %v469
    %v538 = vunpack.c.l.b16 %v470
    %v539 = vunpack.c.h.b16 %v470
    %v540 = vunpack.c.l.b16 %v471
    %v541 = vunpack.c.h.b16 %v471
    %v542 = vunpack.c.l.b16 %v472
    %v543 = vunpack.c.h.b16 %v472
    %v544 = vunpack.c.l.b16 %v473
    %v545 = vunpack.c.h.b16 %v473
    %v546 = vunpack.c.l.b16 %v474
    %v547 = vunpack.c.h.b16 %v474
    %v548 = vunpack.c.l.b16 %v475
    %v549 = vunpack.c.h.b16 %v475
    %v550 = vunpack.c.l.b16 %v476
    %v551 = vunpack.c.h.b16 %v476
    %v552 = vunpack.c.l.b16 %v477
    %v553 = vunpack.c.h.b16 %v477
    %v554 = vunpack.c.l.b16 %v478
    %v555 = vunpack.c.h.b16 %v478
    %v556 = vunpack.c.l.b16 %v479
    %v557 = vunpack.c.h.b16 %v479
    %v558 = vunpack.c.l.b16 %v480
    %v559 = vunpack.c.h.b16 %v480
    %v560 = vunpack.c.l.b16 %v481
    %v561 = vunpack.c.h.b16 %v481
    %v562 = vunpack.c.l.b16 %v482
    %v563 = vunpack.c.h.b16 %v482
    %v564 = vunpack.c.l.b16 %v483
    %v565 = vunpack.c.h.b16 %v483
    %v566 = vunpack.c.l.b16 %v484
    %v567 = vunpack.c.h.b16 %v484
    %v568 = vunpack.c.l.b16 %v485
    %v569 = vunpack.c.h.b16 %v485
    %v570 = vunpack.c.l.b16 %v486
    %v571 = vunpack.c.h.b16 %v486
    %v572 = vunpack.c.l.b16 %v487
    %v573 = vunpack.c.h.b16 %v487
    %v574 = vunpack.c.l.b16 %v488
    %v575 = vunpack.c.h.b16 %v488
    %v576 = vunpack.c.l.b16 %v489
    %v577 = vunpack.c.h.b16 %v489
    %v578 = vunpack.c.l.b16 %v490
    %v579 = vunpack.c.h.b16 %v490
    %v580 = vunpack.c.l.b16 %v491
    %v581 = vunpack.c.h.b16 %v491
    %v582 = vunpack.c.l.b16 %v492
    %v583 = vunpack.c.h.b16 %v492
    %v584 = vunpack.c.l.b16 %v493
    %v585 = vunpack.c.h.b16 %v493
    %v586 = vunpack.c.l.b16 %v494
    %v587 = vunpack.c.h.b16 %v494
    %v588 = vunpack.c.l.b16 %v495
    %v589 = vunpack.c.h.b16 %v495
    %v590 = vunpack.c.l.b16 %v496
    %v591 = vunpack.c.h.b16 %v496
    %v592 = vunpack.c.l.b16 %v497
    %v593 = vunpack.c.h.b16 %v497
    %v594 = vpack.c.b16 %v532, %v530
    %v595 = vpack.c.b16 %v533, %v531
    %v596 = vpack.c.b16 %v536, %v534
    %v597 = vpack.c.b16 %v537, %v535
    %v598 = vpack.c.b16 %v540, %v538
    %v599 = vpack.c.b16 %v541, %v539
    %v600 = vpack.c.b16 %v544, %v542
    %v601 = vpack.c.b16 %v545, %v543
    %v602 = vpack.c.b16 %v548, %v546
    %v603 = vpack.c.b16 %v549, %v547
    %v604 = vpack.c.b16 %v552, %v550
    %v605 = vpack.c.b16 %v553, %v551
    %v606 = vpack.c.b16 %v556, %v554
    %v607 = vpack.c.b16 %v557, %v555
    %v608 = vpack.c.b16 %v560, %v558
    %v609 = vpack.c.b16 %v561, %v559
    %v610 = vpack.c.b16 %v564, %v562
    %v611 = vpack.c.b16 %v565, %v563
    %v612 = vpack.c.b16 %v568, %v566
    %v613 = vpack.c.b16 %v569, %v567
    %v614 = vpack.c.b16 %v572, %v570
    %v615 = vpack.c.b16 %v573, %v571
    %v616 = vpack.c.b16 %v576, %v574
    %v617 = vpack.c.b16 %v577, %v575
    %v618 = vpack.c.b16 %v580, %v578
    %v619 = vpack.c.b16 %v581, %v579
    %v620 = vpack.c.b16 %v584, %v582
    %v621 = vpack.c.b16 %v585, %v583
    %v622 = vpack.c.b16 %v588, %v586
    %v623 = vpack.c.b16 %v589, %v587
    %v624 = vpack.c.b16 %v592, %v590
    %v625 = vpack.c.b16 %v593, %v591
    %658 = vmatprep.subr.bf16.mxu0 %v595
    %659 = vmatpush1.bf16.msra.mxu0 %v594
    %660 = vmatprep.subr.bf16.mxu0 %v597
    %661 = vmatpush1.bf16.msra.mxu0 %v596
    %662 = vmatprep.subr.bf16.mxu0 %v599
    %663 = vmatpush1.bf16.msra.mxu0 %v598
    %664 = vmatprep.subr.bf16.mxu0 %v601
    %665 = vmatpush1.bf16.msra.mxu0 %v600
    %666 = vmatprep.subr.bf16.mxu0 %v603
    %667 = vmatpush1.bf16.msra.mxu0 %v602
    %668 = vmatprep.subr.bf16.mxu0 %v605
    %669 = vmatpush1.bf16.msra.mxu0 %v604
    %670 = vmatprep.subr.bf16.mxu0 %v607
    %671 = vmatpush1.bf16.msra.mxu0 %v606
    %672 = vmatprep.subr.bf16.mxu0 %v609
    %673 = vmatpush1.bf16.msra.mxu0 %v608
    %674 = vmatprep.subr.bf16.mxu0 %v611
    %675 = vmatpush1.bf16.msra.mxu0 %v610
    %676 = vmatprep.subr.bf16.mxu0 %v613
    %677 = vmatpush1.bf16.msra.mxu0 %v612
    %678 = vmatprep.subr.bf16.mxu0 %v615
    %679 = vmatpush1.bf16.msra.mxu0 %v614
    %680 = vmatprep.subr.bf16.mxu0 %v617
    %681 = vmatpush1.bf16.msra.mxu0 %v616
    %682 = vmatprep.subr.bf16.mxu0 %v619
    %683 = vmatpush1.bf16.msra.mxu0 %v618
    %684 = vmatprep.subr.bf16.mxu0 %v621
    %685 = vmatpush1.bf16.msra.mxu0 %v620
    %686 = vmatprep.subr.bf16.mxu0 %v623
    %687 = vmatpush1.bf16.msra.mxu0 %v622
    %688 = vmatprep.subr.bf16.mxu0 %v625
    %689 = vmatpush1.bf16.msra.mxu0 %v624
    %690 = vmatprep.mubr.bf16.mxu0 %v465
    %691 = vmatmul.mubr.bf16.gmra.mrb[0].mxu0 %v464
    %v692 = vpop.f32.mrb[0].mxu0
    %v693 = vadd.f32 0.0, %v692
    %v694 = vpop.f32.mrb[0].mxu0
    %v695 = vadd.f32 0.0, %v694
    %v696 = vpop.f32.mrb[0].mxu0
    %v697 = vpop.f32.mrb[0].mxu0
    %698 = vdwg.mxu0
    %v699 = vld [vmem:[#allocation14] sm:$0x3]
    %v700 = vld [vmem:[%s6] sm:$0x3]
    %v701 = vrot.slane %v693, 4
    %v702 = vadd.f32 %v693, %v701
    %v703 = vrot.slane %v702, 2
    %v704 = vadd.f32 %v702, %v703
    %v705 = vrot.slane %v704, 1
    %v706 = vadd.f32 %v704, %v705
    %v707 = vrot.slane %v695, 4
    %v708 = vadd.f32 %v695, %v707
    %v709 = vrot.slane %v708, 2
    %v710 = vadd.f32 %v708, %v709
    %v711 = vrot.slane %v710, 1
    %v712 = vadd.f32 %v710, %v711
    %v713 = vmul.f32 %v706, %v390
    %v714 = vmul.f32 %v712, %v390
    %v715 = vsub.f32 %v693, %v713
    %v716 = vsub.f32 %v695, %v714
    %v717 = vmul.f32 %v715, %v715
    %v718 = vmul.f32 %v716, %v716
    %v719 = vrot.slane %v717, 4
    %v720 = vadd.f32 %v717, %v719
    %v721 = vrot.slane %v720, 2
    %v722 = vadd.f32 %v720, %v721
    %v723 = vrot.slane %v722, 1
    %v724 = vadd.f32 %v722, %v723
    %v725 = vrot.slane %v718, 4
    %v726 = vadd.f32 %v718, %v725
    %v727 = vrot.slane %v726, 2
    %v728 = vadd.f32 %v726, %v727
    %v729 = vrot.slane %v728, 1
    %v730 = vadd.f32 %v728, %v729
    %v731 = vmul.f32 %v724, %v390
    %v732 = vmul.f32 %v730, %v390
    %v733 = vadd.f32 %v731, 1e-05
    %v734 = vadd.f32 %v732, 1e-05
    %v735 = vrsqrt.pop %v733
    %v736 = vrsqrt.pop %v734
    %v739 = vcombine.low %v735, %v736
    %v741 = vunpack.c.l.s4 1966171168
    %v742 = vunpack.c.0.s8 %v741
    %v743 = vlaneseq
    %v744 = vshrl.u32 %v743, 7
    %v745 = vsub.s32 %v742, %v744
    %v746 = vrot.slane %v739, %v745
    %v748 = vunpack.c.l.s4 1966171168
    %v749 = vunpack.c.0.s8 %v748
    %v750 = vlaneseq
    %v751 = vshrl.u32 %v750, 7
    %v752 = vsub.s32 %v749, %v751
    %v753 = vrot.slane %v746, %v752
    %v755 = vmul.f32 %v699, %v753
    %v757 = vlaneseq
    %v758 = vshrl.u32 %v757, 7
    %v759 = vsub.s32 0, %v758
    %v760 = vrot.slane %v755, %v759
    %v761 = vlaneseq
    %v762 = vshrl.u32 %v761, 7
    %v763 = vsub.s32 1, %v762
    %v764 = vrot.slane %v755, %v763
    %v767 = vmul.f32 %v715, %v760
    %v768 = vmul.f32 %v716, %v764
    %v770 = vlaneseq
    %v771 = vshrl.u32 %v770, 7
    %v772 = vsub.s32 0, %v771
    %v773 = vrot.slane %v700, %v772
    %v774 = vlaneseq
    %v775 = vshrl.u32 %v774, 7
    %v776 = vsub.s32 1, %v775
    %v777 = vrot.slane %v700, %v776
    %v780 = vadd.f32 %v767, %v773
    %v781 = vadd.f32 %v768, %v777
    %v782 = vmul.f32 %v780, 0.01
    %v783 = vmul.f32 %v781, 0.01
    %v784 = vmax.f32 %v780, %v782
    %v785 = vmax.f32 %v781, %v783
    %s786 = smul.u32 4, 32
    %s787 = smul.u32 %s786, 4
    %s788 = sshll.u32 %s787, 4
    %789 = dma.done [#allocation4], %s788
    %v790 = vpack.c.bf16 %v784, %v784
    %v791 = vpack.c.bf16 %v785, %v785
    %v792 = vld [vmem:[#allocation2] sm:$0xff]
    %v793 = vld [vmem:[#allocation2 + $0x8] sm:$0xff]
    %v794 = vld [vmem:[#allocation2 + $0x10] sm:$0xff]
    %v795 = vld [vmem:[#allocation2 + $0x18] sm:$0xff]
    %v796 = vld [vmem:[#allocation2 + $0x20] sm:$0xff]
    %v797 = vld [vmem:[#allocation2 + $0x28] sm:$0xff]
    %v798 = vld [vmem:[#allocation2 + $0x30] sm:$0xff]
    %v799 = vld [vmem:[#allocation2 + $0x38] sm:$0xff]
    %v800 = vld [vmem:[#allocation2 + $0x40] sm:$0xff]
    %v801 = vld [vmem:[#allocation2 + $0x48] sm:$0xff]
    %v802 = vld [vmem:[#allocation2 + $0x50] sm:$0xff]
    %v803 = vld [vmem:[#allocation2 + $0x58] sm:$0xff]
    %v804 = vld [vmem:[#allocation2 + $0x60] sm:$0xff]
    %v805 = vld [vmem:[#allocation2 + $0x68] sm:$0xff]
    %v806 = vld [vmem:[#allocation2 + $0x70] sm:$0xff]
    %v807 = vld [vmem:[#allocation2 + $0x78] sm:$0xff]
    %v808 = vld [vmem:[#allocation2 + $0x80] sm:$0xff]
    %v809 = vld [vmem:[#allocation2 + $0x88] sm:$0xff]
    %v810 = vld [vmem:[#allocation2 + $0x90] sm:$0xff]
    %v811 = vld [vmem:[#allocation2 + $0x98] sm:$0xff]
    %v812 = vld [vmem:[#allocation2 + $0xa0] sm:$0xff]
    %v813 = vld [vmem:[#allocation2 + $0xa8] sm:$0xff]
    %v814 = vld [vmem:[#allocation2 + $0xb0] sm:$0xff]
    %v815 = vld [vmem:[#allocation2 + $0xb8] sm:$0xff]
    %v816 = vld [vmem:[#allocation2 + $0xc0] sm:$0xff]
    %v817 = vld [vmem:[#allocation2 + $0xc8] sm:$0xff]
    %v818 = vld [vmem:[#allocation2 + $0xd0] sm:$0xff]
    %v819 = vld [vmem:[#allocation2 + $0xd8] sm:$0xff]
    %v820 = vld [vmem:[#allocation2 + $0xe0] sm:$0xff]
    %v821 = vld [vmem:[#allocation2 + $0xe8] sm:$0xff]
    %v822 = vld [vmem:[#allocation2 + $0xf0] sm:$0xff]
    %v823 = vld [vmem:[#allocation2 + $0xf8] sm:$0xff]
    %v824 = vld [vmem:[#allocation2 + $0x100] sm:$0xff]
    %v825 = vld [vmem:[#allocation2 + $0x108] sm:$0xff]
    %v826 = vld [vmem:[#allocation2 + $0x110] sm:$0xff]
    %v827 = vld [vmem:[#allocation2 + $0x118] sm:$0xff]
    %v828 = vld [vmem:[#allocation2 + $0x120] sm:$0xff]
    %v829 = vld [vmem:[#allocation2 + $0x128] sm:$0xff]
    %v830 = vld [vmem:[#allocation2 + $0x130] sm:$0xff]
    %v831 = vld [vmem:[#allocation2 + $0x138] sm:$0xff]
    %v832 = vld [vmem:[#allocation2 + $0x140] sm:$0xff]
    %v833 = vld [vmem:[#allocation2 + $0x148] sm:$0xff]
    %v834 = vld [vmem:[#allocation2 + $0x150] sm:$0xff]
    %v835 = vld [vmem:[#allocation2 + $0x158] sm:$0xff]
    %v836 = vld [vmem:[#allocation2 + $0x160] sm:$0xff]
    %v837 = vld [vmem:[#allocation2 + $0x168] sm:$0xff]
    %v838 = vld [vmem:[#allocation2 + $0x170] sm:$0xff]
    %v839 = vld [vmem:[#allocation2 + $0x178] sm:$0xff]
    %v840 = vld [vmem:[#allocation2 + $0x180] sm:$0xff]
    %v841 = vld [vmem:[#allocation2 + $0x188] sm:$0xff]
    %v842 = vld [vmem:[#allocation2 + $0x190] sm:$0xff]
    %v843 = vld [vmem:[#allocation2 + $0x198] sm:$0xff]
    %v844 = vld [vmem:[#allocation2 + $0x1a0] sm:$0xff]
    %v845 = vld [vmem:[#allocation2 + $0x1a8] sm:$0xff]
    %v846 = vld [vmem:[#allocation2 + $0x1b0] sm:$0xff]
    %v847 = vld [vmem:[#allocation2 + $0x1b8] sm:$0xff]
    %v848 = vld [vmem:[#allocation2 + $0x1c0] sm:$0xff]
    %v849 = vld [vmem:[#allocation2 + $0x1c8] sm:$0xff]
    %v850 = vld [vmem:[#allocation2 + $0x1d0] sm:$0xff]
    %v851 = vld [vmem:[#allocation2 + $0x1d8] sm:$0xff]
    %v852 = vld [vmem:[#allocation2 + $0x1e0] sm:$0xff]
    %v853 = vld [vmem:[#allocation2 + $0x1e8] sm:$0xff]
    %v854 = vld [vmem:[#allocation2 + $0x1f0] sm:$0xff]
    %v855 = vld [vmem:[#allocation2 + $0x1f8] sm:$0xff]
    %856 = vmatprep.subr.bf16.mxu0 %v793
    %857 = vmatpush1.bf16.msra.mxu0 %v792
    %858 = vmatprep.subr.bf16.mxu0 %v797
    %859 = vmatpush1.bf16.msra.mxu0 %v796
    %860 = vmatprep.subr.bf16.mxu0 %v801
    %861 = vmatpush1.bf16.msra.mxu0 %v800
    %862 = vmatprep.subr.bf16.mxu0 %v805
    %863 = vmatpush1.bf16.msra.mxu0 %v804
    %864 = vmatprep.subr.bf16.mxu0 %v809
    %865 = vmatpush1.bf16.msra.mxu0 %v808
    %866 = vmatprep.subr.bf16.mxu0 %v813
    %867 = vmatpush1.bf16.msra.mxu0 %v812
    %868 = vmatprep.subr.bf16.mxu0 %v817
    %869 = vmatpush1.bf16.msra.mxu0 %v816
    %870 = vmatprep.subr.bf16.mxu0 %v821
    %871 = vmatpush1.bf16.msra.mxu0 %v820
    %872 = vmatprep.subr.bf16.mxu0 %v825
    %873 = vmatpush1.bf16.msra.mxu0 %v824
    %874 = vmatprep.subr.bf16.mxu0 %v829
    %875 = vmatpush1.bf16.msra.mxu0 %v828
    %876 = vmatprep.subr.bf16.mxu0 %v833
    %877 = vmatpush1.bf16.msra.mxu0 %v832
    %878 = vmatprep.subr.bf16.mxu0 %v837
    %879 = vmatpush1.bf16.msra.mxu0 %v836
    %880 = vmatprep.subr.bf16.mxu0 %v841
    %881 = vmatpush1.bf16.msra.mxu0 %v840
    %882 = vmatprep.subr.bf16.mxu0 %v845
    %883 = vmatpush1.bf16.msra.mxu0 %v844
    %884 = vmatprep.subr.bf16.mxu0 %v849
    %885 = vmatpush1.bf16.msra.mxu0 %v848
    %886 = vmatprep.subr.bf16.mxu0 %v853
    %887 = vmatpush1.bf16.msra.mxu0 %v852
    %888 = vmatprep.mubr.bf16.mxu0 %v791
    %889 = vmatmul.mubr.bf16.gmra.mrb[0].mxu0 %v790
    %v890 = vpop.f32.mrb[0].mxu0
    %v891 = vadd.f32 0.0, %v890
    %v892 = vpop.f32.mrb[0].mxu0
    %v893 = vadd.f32 0.0, %v892
    %v894 = vpop.f32.mrb[0].mxu0
    %v895 = vpop.f32.mrb[0].mxu0
    %896 = vdwg.mxu0
    %897 = vmatprep.subr.bf16.mxu0 %v795
    %898 = vmatpush1.bf16.msra.mxu0 %v794
    %899 = vmatprep.subr.bf16.mxu0 %v799
    %900 = vmatpush1.bf16.msra.mxu0 %v798
    %901 = vmatprep.subr.bf16.mxu0 %v803
    %902 = vmatpush1.bf16.msra.mxu0 %v802
    %903 = vmatprep.subr.bf16.mxu0 %v807
    %904 = vmatpush1.bf16.msra.mxu0 %v806
    %905 = vmatprep.subr.bf16.mxu0 %v811
    %906 = vmatpush1.bf16.msra.mxu0 %v810
    %907 = vmatprep.subr.bf16.mxu0 %v815
    %908 = vmatpush1.bf16.msra.mxu0 %v814
    %909 = vmatprep.subr.bf16.mxu0 %v819
    %910 = vmatpush1.bf16.msra.mxu0 %v818
    %911 = vmatprep.subr.bf16.mxu0 %v823
    %912 = vmatpush1.bf16.msra.mxu0 %v822
    %913 = vmatprep.subr.bf16.mxu0 %v827
    %914 = vmatpush1.bf16.msra.mxu0 %v826
    %915 = vmatprep.subr.bf16.mxu0 %v831
    %916 = vmatpush1.bf16.msra.mxu0 %v830
    %917 = vmatprep.subr.bf16.mxu0 %v835
    %918 = vmatpush1.bf16.msra.mxu0 %v834
    %919 = vmatprep.subr.bf16.mxu0 %v839
    %920 = vmatpush1.bf16.msra.mxu0 %v838
    %921 = vmatprep.subr.bf16.mxu0 %v843
    %922 = vmatpush1.bf16.msra.mxu0 %v842
    %923 = vmatprep.subr.bf16.mxu0 %v847
    %924 = vmatpush1.bf16.msra.mxu0 %v846
    %925 = vmatprep.subr.bf16.mxu0 %v851
    %926 = vmatpush1.bf16.msra.mxu0 %v850
    %927 = vmatprep.subr.bf16.mxu0 %v855
    %928 = vmatpush1.bf16.msra.mxu0 %v854
    %929 = vmatprep.mubr.bf16.mxu0 %v791
    %930 = vmatmul.mubr.bf16.gmra.mrb[0].mxu0 %v790
    %v931 = vpop.f32.mrb[0].mxu0
    %v932 = vadd.f32 0.0, %v931
    %v933 = vpop.f32.mrb[0].mxu0
    %v934 = vadd.f32 0.0, %v933
    %v935 = vpop.f32.mrb[0].mxu0
    %v936 = vpop.f32.mrb[0].mxu0
    %937 = vdwg.mxu0
    %v938 = vld [vmem:[%s8] sm:$0xf]
    %v939 = vld [vmem:[%s9] sm:$0xf]
    %v940 = vrot.slane %v891, 4
    %v941 = vadd.f32 %v891, %v940
    %v942 = vrot.slane %v941, 2
    %v943 = vadd.f32 %v941, %v942
    %v944 = vrot.slane %v943, 1
    %v945 = vadd.f32 %v943, %v944
    %v946 = vrot.slane %v893, 4
    %v947 = vadd.f32 %v893, %v946
    %v948 = vrot.slane %v947, 2
    %v949 = vadd.f32 %v947, %v948
    %v950 = vrot.slane %v949, 1
    %v951 = vadd.f32 %v949, %v950
    %v952 = vrot.slane %v932, 4
    %v953 = vadd.f32 %v932, %v952
    %v954 = vrot.slane %v953, 2
    %v955 = vadd.f32 %v953, %v954
    %v956 = vrot.slane %v955, 1
    %v957 = vadd.f32 %v955, %v956
    %v958 = vrot.slane %v934, 4
    %v959 = vadd.f32 %v934, %v958
    %v960 = vrot.slane %v959, 2
    %v961 = vadd.f32 %v959, %v960
    %v962 = vrot.slane %v961, 1
    %v963 = vadd.f32 %v961, %v962
    %v964 = vmul.f32 %v945, %v390
    %v965 = vmul.f32 %v951, %v390
    %v966 = vmul.f32 %v957, %v390
    %v967 = vmul.f32 %v963, %v390
    %v968 = vsub.f32 %v891, %v964
    %v969 = vsub.f32 %v893, %v965
    %v970 = vsub.f32 %v932, %v966
    %v971 = vsub.f32 %v934, %v967
    %v972 = vmul.f32 %v968, %v968
    %v973 = vmul.f32 %v969, %v969
    %v974 = vmul.f32 %v970, %v970
    %v975 = vmul.f32 %v971, %v971
    %v976 = vrot.slane %v972, 4
    %v977 = vadd.f32 %v972, %v976
    %v978 = vrot.slane %v977, 2
    %v979 = vadd.f32 %v977, %v978
    %v980 = vrot.slane %v979, 1
    %v981 = vadd.f32 %v979, %v980
    %v982 = vrot.slane %v973, 4
    %v983 = vadd.f32 %v973, %v982
    %v984 = vrot.slane %v983, 2
    %v985 = vadd.f32 %v983, %v984
    %v986 = vrot.slane %v985, 1
    %v987 = vadd.f32 %v985, %v986
    %v988 = vrot.slane %v974, 4
    %v989 = vadd.f32 %v974, %v988
    %v990 = vrot.slane %v989, 2
    %v991 = vadd.f32 %v989, %v990
    %v992 = vrot.slane %v991, 1
    %v993 = vadd.f32 %v991, %v992
    %v994 = vrot.slane %v975, 4
    %v995 = vadd.f32 %v975, %v994
    %v996 = vrot.slane %v995, 2
    %v997 = vadd.f32 %v995, %v996
    %v998 = vrot.slane %v997, 1
    %v999 = vadd.f32 %v997, %v998
    %v1000 = vmul.f32 %v981, %v390
    %v1001 = vmul.f32 %v987, %v390
    %v1002 = vmul.f32 %v993, %v390
    %v1003 = vmul.f32 %v999, %v390
    %v1004 = vadd.f32 %v1000, 1e-05
    %v1005 = vadd.f32 %v1001, 1e-05
    %v1006 = vadd.f32 %v1002, 1e-05
    %v1007 = vadd.f32 %v1003, 1e-05
    %v1008 = vrsqrt.pop %v1004
    %v1009 = vrsqrt.pop %v1005
    %v1010 = vrsqrt.pop %v1006
    %v1011 = vrsqrt.pop %v1007
    %v1016 = vcombine.low %v1008, %v1009
    %v1017 = vcombine.low %v1010, %v1011
    %v1019 = vunpack.c.l.s4 1966171168
    %v1020 = vunpack.c.0.s8 %v1019
    %v1021 = vlaneseq
    %v1022 = vshrl.u32 %v1021, 7
    %v1023 = vsub.s32 %v1020, %v1022
    %v1024 = vrot.slane %v1016, %v1023
    %v1026 = vunpack.c.l.s4 1966171168
    %v1027 = vunpack.c.0.s8 %v1026
    %v1028 = vlaneseq
    %v1029 = vshrl.u32 %v1028, 7
    %v1030 = vsub.s32 %v1027, %v1029
    %v1031 = vrot.slane %v1017, %v1030
    %v1032 = vcombine.low %v1024, %v1031
    %v1034 = vunpack.c.l.s4 1966171168
    %v1035 = vunpack.c.0.s8 %v1034
    %v1036 = vlaneseq
    %v1037 = vshrl.u32 %v1036, 7
    %v1038 = vsub.s32 %v1035, %v1037
    %v1039 = vrot.slane %v1032, %v1038
    %v1041 = vmul.f32 %v938, %v1039
    %v1043 = vlaneseq
    %v1044 = vshrl.u32 %v1043, 7
    %v1045 = vsub.s32 0, %v1044
    %v1046 = vrot.slane %v1041, %v1045
    %v1047 = vlaneseq
    %v1048 = vshrl.u32 %v1047, 7
    %v1049 = vsub.s32 1, %v1048
    %v1050 = vrot.slane %v1041, %v1049
    %v1051 = vlaneseq
    %v1052 = vshrl.u32 %v1051, 7
    %v1053 = vsub.s32 2, %v1052
    %v1054 = vrot.slane %v1041, %v1053
    %v1055 = vlaneseq
    %v1056 = vshrl.u32 %v1055, 7
    %v1057 = vsub.s32 3, %v1056
    %v1058 = vrot.slane %v1041, %v1057
    %v1063 = vmul.f32 %v968, %v1046
    %v1064 = vmul.f32 %v969, %v1050
    %v1065 = vmul.f32 %v970, %v1054
    %v1066 = vmul.f32 %v971, %v1058
    %v1068 = vlaneseq
    %v1069 = vshrl.u32 %v1068, 7
    %v1070 = vsub.s32 0, %v1069
    %v1071 = vrot.slane %v939, %v1070
    %v1072 = vlaneseq
    %v1073 = vshrl.u32 %v1072, 7
    %v1074 = vsub.s32 1, %v1073
    %v1075 = vrot.slane %v939, %v1074
    %v1076 = vlaneseq
    %v1077 = vshrl.u32 %v1076, 7
    %v1078 = vsub.s32 2, %v1077
    %v1079 = vrot.slane %v939, %v1078
    %v1080 = vlaneseq
    %v1081 = vshrl.u32 %v1080, 7
    %v1082 = vsub.s32 3, %v1081
    %v1083 = vrot.slane %v939, %v1082
    %v1088 = vadd.f32 %v1063, %v1071
    %v1089 = vadd.f32 %v1064, %v1075
    %v1090 = vadd.f32 %v1065, %v1079
    %v1091 = vadd.f32 %v1066, %v1083
    %v1092 = vmul.f32 %v1088, 0.01
    %v1093 = vmul.f32 %v1089, 0.01
    %v1094 = vmul.f32 %v1090, 0.01
    %v1095 = vmul.f32 %v1091, 0.01
    %v1096 = vmax.f32 %v1088, %v1092
    %v1097 = vmax.f32 %v1089, %v1093
    %v1098 = vmax.f32 %v1090, %v1094
    %v1099 = vmax.f32 %v1091, %v1095
    %v1100 = vpack.c.bf16 %v1096, %v1096
    %v1101 = vpack.c.bf16 %v1097, %v1097
    %v1102 = vpack.c.bf16 %v1098, %v1098
    %v1103 = vpack.c.bf16 %v1099, %v1099
    %s1104 = smul.u32 4, 64
    %s1105 = smul.u32 %s1104, 2
    %s1106 = sshll.u32 %s1105, 4
    %1107 = dma.done [#allocation5], %s1106
    %v1108 = vld [vmem:[#allocation3] sm:$0xff]
    %v1109 = vld [vmem:[#allocation3 + $0x8] sm:$0xff]
    %v1110 = vld [vmem:[#allocation3 + $0x40] sm:$0xff]
    %v1111 = vld [vmem:[#allocation3 + $0x48] sm:$0xff]
    %v1112 = vld [vmem:[#allocation3 + $0x80] sm:$0xff]
    %v1113 = vld [vmem:[#allocation3 + $0x88] sm:$0xff]
    %v1114 = vld [vmem:[#allocation3 + $0xc0] sm:$0xff]
    %v1115 = vld [vmem:[#allocation3 + $0xc8] sm:$0xff]
    %v1116 = vld [vmem:[#allocation3 + $0x100] sm:$0xff]
    %v1117 = vld [vmem:[#allocation3 + $0x108] sm:$0xff]
    %v1118 = vld [vmem:[#allocation3 + $0x140] sm:$0xff]
    %v1119 = vld [vmem:[#allocation3 + $0x148] sm:$0xff]
    %v1120 = vld [vmem:[#allocation3 + $0x180] sm:$0xff]
    %v1121 = vld [vmem:[#allocation3 + $0x188] sm:$0xff]
    %v1122 = vld [vmem:[#allocation3 + $0x1c0] sm:$0xff]
    %v1123 = vld [vmem:[#allocation3 + $0x1c8] sm:$0xff]
    %v1124 = vld [vmem:[#allocation3 + $0x200] sm:$0xff]
    %v1125 = vld [vmem:[#allocation3 + $0x208] sm:$0xff]
    %v1126 = vld [vmem:[#allocation3 + $0x240] sm:$0xff]
    %v1127 = vld [vmem:[#allocation3 + $0x248] sm:$0xff]
    %v1128 = vld [vmem:[#allocation3 + $0x280] sm:$0xff]
    %v1129 = vld [vmem:[#allocation3 + $0x288] sm:$0xff]
    %v1130 = vld [vmem:[#allocation3 + $0x2c0] sm:$0xff]
    %v1131 = vld [vmem:[#allocation3 + $0x2c8] sm:$0xff]
    %v1132 = vld [vmem:[#allocation3 + $0x300] sm:$0xff]
    %v1133 = vld [vmem:[#allocation3 + $0x308] sm:$0xff]
    %v1134 = vld [vmem:[#allocation3 + $0x340] sm:$0xff]
    %v1135 = vld [vmem:[#allocation3 + $0x348] sm:$0xff]
    %v1136 = vld [vmem:[#allocation3 + $0x380] sm:$0xff]
    %v1137 = vld [vmem:[#allocation3 + $0x388] sm:$0xff]
    %v1138 = vld [vmem:[#allocation3 + $0x3c0] sm:$0xff]
    %v1139 = vld [vmem:[#allocation3 + $0x3c8] sm:$0xff]
    %v1140 = vld [vmem:[#allocation3 + $0x400] sm:$0xff]
    %v1141 = vld [vmem:[#allocation3 + $0x408] sm:$0xff]
    %v1142 = vld [vmem:[#allocation3 + $0x440] sm:$0xff]
    %v1143 = vld [vmem:[#allocation3 + $0x448] sm:$0xff]
    %v1144 = vld [vmem:[#allocation3 + $0x480] sm:$0xff]
    %v1145 = vld [vmem:[#allocation3 + $0x488] sm:$0xff]
    %v1146 = vld [vmem:[#allocation3 + $0x4c0] sm:$0xff]
    %v1147 = vld [vmem:[#allocation3 + $0x4c8] sm:$0xff]
    %v1148 = vld [vmem:[#allocation3 + $0x500] sm:$0xff]
    %v1149 = vld [vmem:[#allocation3 + $0x508] sm:$0xff]
    %v1150 = vld [vmem:[#allocation3 + $0x540] sm:$0xff]
    %v1151 = vld [vmem:[#allocation3 + $0x548] sm:$0xff]
    %v1152 = vld [vmem:[#allocation3 + $0x580] sm:$0xff]
    %v1153 = vld [vmem:[#allocation3 + $0x588] sm:$0xff]
    %v1154 = vld [vmem:[#allocation3 + $0x5c0] sm:$0xff]
    %v1155 = vld [vmem:[#allocation3 + $0x5c8] sm:$0xff]
    %v1156 = vld [vmem:[#allocation3 + $0x600] sm:$0xff]
    %v1157 = vld [vmem:[#allocation3 + $0x608] sm:$0xff]
    %v1158 = vld [vmem:[#allocation3 + $0x640] sm:$0xff]
    %v1159 = vld [vmem:[#allocation3 + $0x648] sm:$0xff]
    %v1160 = vld [vmem:[#allocation3 + $0x680] sm:$0xff]
    %v1161 = vld [vmem:[#allocation3 + $0x688] sm:$0xff]
    %v1162 = vld [vmem:[#allocation3 + $0x6c0] sm:$0xff]
    %v1163 = vld [vmem:[#allocation3 + $0x6c8] sm:$0xff]
    %v1164 = vld [vmem:[#allocation3 + $0x700] sm:$0xff]
    %v1165 = vld [vmem:[#allocation3 + $0x708] sm:$0xff]
    %v1166 = vld [vmem:[#allocation3 + $0x740] sm:$0xff]
    %v1167 = vld [vmem:[#allocation3 + $0x748] sm:$0xff]
    %v1168 = vld [vmem:[#allocation3 + $0x780] sm:$0xff]
    %v1169 = vld [vmem:[#allocation3 + $0x788] sm:$0xff]
    %v1170 = vld [vmem:[#allocation3 + $0x7c0] sm:$0xff]
    %v1171 = vld [vmem:[#allocation3 + $0x7c8] sm:$0xff]
    %v1172 = vld [vmem:[%s11] sm:$0x3]
    %v1174 = vlaneseq
    %v1175 = vshrl.u32 %v1174, 7
    %v1176 = vsub.s32 0, %v1175
    %v1177 = vrot.slane %v1172, %v1176
    %v1178 = vlaneseq
    %v1179 = vshrl.u32 %v1178, 7
    %v1180 = vsub.s32 1, %v1179
    %v1181 = vrot.slane %v1172, %v1180
    %1184 = vmatprep.subr.bf16.mxu0 %v1109
    %1185 = vmatpush1.bf16.msra.mxu0 %v1108
    %1186 = vmatprep.subr.bf16.mxu0 %v1111
    %1187 = vmatpush1.bf16.msra.mxu0 %v1110
    %1188 = vmatprep.subr.bf16.mxu0 %v1113
    %1189 = vmatpush1.bf16.msra.mxu0 %v1112
    %1190 = vmatprep.subr.bf16.mxu0 %v1115
    %1191 = vmatpush1.bf16.msra.mxu0 %v1114
    %1192 = vmatprep.subr.bf16.mxu0 %v1117
    %1193 = vmatpush1.bf16.msra.mxu0 %v1116
    %1194 = vmatprep.subr.bf16.mxu0 %v1119
    %1195 = vmatpush1.bf16.msra.mxu0 %v1118
    %1196 = vmatprep.subr.bf16.mxu0 %v1121
    %1197 = vmatpush1.bf16.msra.mxu0 %v1120
    %1198 = vmatprep.subr.bf16.mxu0 %v1123
    %1199 = vmatpush1.bf16.msra.mxu0 %v1122
    %1200 = vmatprep.subr.bf16.mxu0 %v1125
    %1201 = vmatpush1.bf16.msra.mxu0 %v1124
    %1202 = vmatprep.subr.bf16.mxu0 %v1127
    %1203 = vmatpush1.bf16.msra.mxu0 %v1126
    %1204 = vmatprep.subr.bf16.mxu0 %v1129
    %1205 = vmatpush1.bf16.msra.mxu0 %v1128
    %1206 = vmatprep.subr.bf16.mxu0 %v1131
    %1207 = vmatpush1.bf16.msra.mxu0 %v1130
    %1208 = vmatprep.subr.bf16.mxu0 %v1133
    %1209 = vmatpush1.bf16.msra.mxu0 %v1132
    %1210 = vmatprep.subr.bf16.mxu0 %v1135
    %1211 = vmatpush1.bf16.msra.mxu0 %v1134
    %1212 = vmatprep.subr.bf16.mxu0 %v1137
    %1213 = vmatpush1.bf16.msra.mxu0 %v1136
    %1214 = vmatprep.subr.bf16.mxu0 %v1139
    %1215 = vmatpush1.bf16.msra.mxu0 %v1138
    %1216 = vmatprep.mubr.bf16.mxu0 %v1101
    %1217 = vmatmul.mubr.bf16.gmra.mrb[0].mxu0 %v1100
    %v1218 = vpop.f32.mrb[0].mxu0
    %v1219 = vadd.f32 %v1177, %v1218
    %v1220 = vpop.f32.mrb[0].mxu0
    %v1221 = vadd.f32 %v1181, %v1220
    %v1222 = vpop.f32.mrb[0].mxu0
    %v1223 = vpop.f32.mrb[0].mxu0
    %1224 = vdwg.mxu0
    %1225 = vmatprep.subr.bf16.mxu0 %v1141
    %1226 = vmatpush1.bf16.msra.mxu0 %v1140
    %1227 = vmatprep.subr.bf16.mxu0 %v1143
    %1228 = vmatpush1.bf16.msra.mxu0 %v1142
    %1229 = vmatprep.subr.bf16.mxu0 %v1145
    %1230 = vmatpush1.bf16.msra.mxu0 %v1144
    %1231 = vmatprep.subr.bf16.mxu0 %v1147
    %1232 = vmatpush1.bf16.msra.mxu0 %v1146
    %1233 = vmatprep.subr.bf16.mxu0 %v1149
    %1234 = vmatpush1.bf16.msra.mxu0 %v1148
    %1235 = vmatprep.subr.bf16.mxu0 %v1151
    %1236 = vmatpush1.bf16.msra.mxu0 %v1150
    %1237 = vmatprep.subr.bf16.mxu0 %v1153
    %1238 = vmatpush1.bf16.msra.mxu0 %v1152
    %1239 = vmatprep.subr.bf16.mxu0 %v1155
    %1240 = vmatpush1.bf16.msra.mxu0 %v1154
    %1241 = vmatprep.subr.bf16.mxu0 %v1157
    %1242 = vmatpush1.bf16.msra.mxu0 %v1156
    %1243 = vmatprep.subr.bf16.mxu0 %v1159
    %1244 = vmatpush1.bf16.msra.mxu0 %v1158
    %1245 = vmatprep.subr.bf16.mxu0 %v1161
    %1246 = vmatpush1.bf16.msra.mxu0 %v1160
    %1247 = vmatprep.subr.bf16.mxu0 %v1163
    %1248 = vmatpush1.bf16.msra.mxu0 %v1162
    %1249 = vmatprep.subr.bf16.mxu0 %v1165
    %1250 = vmatpush1.bf16.msra.mxu0 %v1164
    %1251 = vmatprep.subr.bf16.mxu0 %v1167
    %1252 = vmatpush1.bf16.msra.mxu0 %v1166
    %1253 = vmatprep.subr.bf16.mxu0 %v1169
    %1254 = vmatpush1.bf16.msra.mxu0 %v1168
    %1255 = vmatprep.subr.bf16.mxu0 %v1171
    %1256 = vmatpush1.bf16.msra.mxu0 %v1170
    %1257 = vmatprep.mubr.bf16.mxu0 %v1103
    %1258 = vmatmul.mubr.bf16.gmra.mrb[0].mxu0 %v1102
    %v1259 = vpop.f32.mrb[0].mxu0
    %v1260 = vadd.f32 %v1219, %v1259
    %v1261 = vpop.f32.mrb[0].mxu0
    %v1262 = vadd.f32 %v1221, %v1261
    %v1263 = vpop.f32.mrb[0].mxu0
    %v1264 = vpop.f32.mrb[0].mxu0
    %1265 = vdwg.mxu0
    %v1266 = vxor.u32 %v1260, 2147483648
    %v1267 = vxor.u32 %v1262, 2147483648
    %v1268 = vmul.f32 %v1266, 1.442695
    %v1269 = vpow.pop %v1268
    %v1270 = vmul.f32 %v1267, 1.442695
    %v1271 = vpow.pop %v1270
    %v1272 = vadd.f32 %v1269, 1.0
    %v1273 = vadd.f32 %v1271, 1.0
    %v1274 = vrcp.pop %v1272
    %v1275 = vmul.f32 1.0, %v1274
    %v1276 = vrcp.pop %v1273
    %v1277 = vmul.f32 1.0, %v1276
    %1278 = vst [vmem:[#allocation15] sm:$0xff] %v1275
    %1279 = vst [vmem:[#allocation15 + $0x8] sm:$0xff] %v1277
    %s1280 = sshll.u32 %s1105, 4
    %1281 = dma.done %s172, %s1280
    %v1282 = vld [vmem:[#allocation3 + $0x10] sm:$0xff]
    %v1283 = vld [vmem:[#allocation3 + $0x18] sm:$0xff]
    %v1284 = vld [vmem:[#allocation3 + $0x50] sm:$0xff]
    %v1285 = vld [vmem:[#allocation3 + $0x58] sm:$0xff]
    %v1286 = vld [vmem:[#allocation3 + $0x90] sm:$0xff]
    %v1287 = vld [vmem:[#allocation3 + $0x98] sm:$0xff]
    %v1288 = vld [vmem:[#allocation3 + $0xd0] sm:$0xff]
    %v1289 = vld [vmem:[#allocation3 + $0xd8] sm:$0xff]
    %v1290 = vld [vmem:[#allocation3 + $0x110] sm:$0xff]
    %v1291 = vld [vmem:[#allocation3 + $0x118] sm:$0xff]
    %v1292 = vld [vmem:[#allocation3 + $0x150] sm:$0xff]
    %v1293 = vld [vmem:[#allocation3 + $0x158] sm:$0xff]
    %v1294 = vld [vmem:[#allocation3 + $0x190] sm:$0xff]
    %v1295 = vld [vmem:[#allocation3 + $0x198] sm:$0xff]
    %v1296 = vld [vmem:[#allocation3 + $0x1d0] sm:$0xff]
    %v1297 = vld [vmem:[#allocation3 + $0x1d8] sm:$0xff]
    %v1298 = vld [vmem:[#allocation3 + $0x210] sm:$0xff]
    %v1299 = vld [vmem:[#allocation3 + $0x218] sm:$0xff]
    %v1300 = vld [vmem:[#allocation3 + $0x250] sm:$0xff]
    %v1301 = vld [vmem:[#allocation3 + $0x258] sm:$0xff]
    %v1302 = vld [vmem:[#allocation3 + $0x290] sm:$0xff]
    %v1303 = vld [vmem:[#allocation3 + $0x298] sm:$0xff]
    %v1304 = vld [vmem:[#allocation3 + $0x2d0] sm:$0xff]
    %v1305 = vld [vmem:[#allocation3 + $0x2d8] sm:$0xff]
    %v1306 = vld [vmem:[#allocation3 + $0x310] sm:$0xff]
    %v1307 = vld [vmem:[#allocation3 + $0x318] sm:$0xff]
    %v1308 = vld [vmem:[#allocation3 + $0x350] sm:$0xff]
    %v1309 = vld [vmem:[#allocation3 + $0x358] sm:$0xff]
    %v1310 = vld [vmem:[#allocation3 + $0x390] sm:$0xff]
    %v1311 = vld [vmem:[#allocation3 + $0x398] sm:$0xff]
    %v1312 = vld [vmem:[#allocation3 + $0x3d0] sm:$0xff]
    %v1313 = vld [vmem:[#allocation3 + $0x3d8] sm:$0xff]
    %v1314 = vld [vmem:[#allocation3 + $0x410] sm:$0xff]
    %v1315 = vld [vmem:[#allocation3 + $0x418] sm:$0xff]
    %v1316 = vld [vmem:[#allocation3 + $0x450] sm:$0xff]
    %v1317 = vld [vmem:[#allocation3 + $0x458] sm:$0xff]
    %v1318 = vld [vmem:[#allocation3 + $0x490] sm:$0xff]
    %v1319 = vld [vmem:[#allocation3 + $0x498] sm:$0xff]
    %v1320 = vld [vmem:[#allocation3 + $0x4d0] sm:$0xff]
    %v1321 = vld [vmem:[#allocation3 + $0x4d8] sm:$0xff]
    %v1322 = vld [vmem:[#allocation3 + $0x510] sm:$0xff]
    %v1323 = vld [vmem:[#allocation3 + $0x518] sm:$0xff]
    %v1324 = vld [vmem:[#allocation3 + $0x550] sm:$0xff]
    %v1325 = vld [vmem:[#allocation3 + $0x558] sm:$0xff]
    %v1326 = vld [vmem:[#allocation3 + $0x590] sm:$0xff]
    %v1327 = vld [vmem:[#allocation3 + $0x598] sm:$0xff]
    %v1328 = vld [vmem:[#allocation3 + $0x5d0] sm:$0xff]
    %v1329 = vld [vmem:[#allocation3 + $0x5d8] sm:$0xff]
    %v1330 = vld [vmem:[#allocation3 + $0x610] sm:$0xff]
    %v1331 = vld [vmem:[#allocation3 + $0x618] sm:$0xff]
    %v1332 = vld [vmem:[#allocation3 + $0x650] sm:$0xff]
    %v1333 = vld [vmem:[#allocation3 + $0x658] sm:$0xff]
    %v1334 = vld [vmem:[#allocation3 + $0x690] sm:$0xff]
    %v1335 = vld [vmem:[#allocation3 + $0x698] sm:$0xff]
    %v1336 = vld [vmem:[#allocation3 + $0x6d0] sm:$0xff]
    %v1337 = vld [vmem:[#allocation3 + $0x6d8] sm:$0xff]
    %v1338 = vld [vmem:[#allocation3 + $0x710] sm:$0xff]
    %v1339 = vld [vmem:[#allocation3 + $0x718] sm:$0xff]
    %v1340 = vld [vmem:[#allocation3 + $0x750] sm:$0xff]
    %v1341 = vld [vmem:[#allocation3 + $0x758] sm:$0xff]
    %v1342 = vld [vmem:[#allocation3 + $0x790] sm:$0xff]
    %v1343 = vld [vmem:[#allocation3 + $0x798] sm:$0xff]
    %v1344 = vld [vmem:[#allocation3 + $0x7d0] sm:$0xff]
    %v1345 = vld [vmem:[#allocation3 + $0x7d8] sm:$0xff]
    %v1346 = vld [vmem:[%s11 + $0x2] sm:$0x3]
    %v1348 = vlaneseq
    %v1349 = vshrl.u32 %v1348, 7
    %v1350 = vsub.s32 0, %v1349
    %v1351 = vrot.slane %v1346, %v1350
    %v1352 = vlaneseq
    %v1353 = vshrl.u32 %v1352, 7
    %v1354 = vsub.s32 1, %v1353
    %v1355 = vrot.slane %v1346, %v1354
    %1358 = vmatprep.subr.bf16.mxu0 %v1283
    %1359 = vmatpush1.bf16.msra.mxu0 %v1282
    %1360 = vmatprep.subr.bf16.mxu0 %v1285
    %1361 = vmatpush1.bf16.msra.mxu0 %v1284
    %1362 = vmatprep.subr.bf16.mxu0 %v1287
    %1363 = vmatpush1.bf16.msra.mxu0 %v1286
    %1364 = vmatprep.subr.bf16.mxu0 %v1289
    %1365 = vmatpush1.bf16.msra.mxu0 %v1288
    %1366 = vmatprep.subr.bf16.mxu0 %v1291
    %1367 = vmatpush1.bf16.msra.mxu0 %v1290
    %1368 = vmatprep.subr.bf16.mxu0 %v1293
    %1369 = vmatpush1.bf16.msra.mxu0 %v1292
    %1370 = vmatprep.subr.bf16.mxu0 %v1295
    %1371 = vmatpush1.bf16.msra.mxu0 %v1294
    %1372 = vmatprep.subr.bf16.mxu0 %v1297
    %1373 = vmatpush1.bf16.msra.mxu0 %v1296
    %1374 = vmatprep.subr.bf16.mxu0 %v1299
    %1375 = vmatpush1.bf16.msra.mxu0 %v1298
    %1376 = vmatprep.subr.bf16.mxu0 %v1301
    %1377 = vmatpush1.bf16.msra.mxu0 %v1300
    %1378 = vmatprep.subr.bf16.mxu0 %v1303
    %1379 = vmatpush1.bf16.msra.mxu0 %v1302
    %1380 = vmatprep.subr.bf16.mxu0 %v1305
    %1381 = vmatpush1.bf16.msra.mxu0 %v1304
    %1382 = vmatprep.subr.bf16.mxu0 %v1307
    %1383 = vmatpush1.bf16.msra.mxu0 %v1306
    %1384 = vmatprep.subr.bf16.mxu0 %v1309
    %1385 = vmatpush1.bf16.msra.mxu0 %v1308
    %1386 = vmatprep.subr.bf16.mxu0 %v1311
    %1387 = vmatpush1.bf16.msra.mxu0 %v1310
    %1388 = vmatprep.subr.bf16.mxu0 %v1313
    %1389 = vmatpush1.bf16.msra.mxu0 %v1312
    %1390 = vmatprep.mubr.bf16.mxu0 %v1101
    %1391 = vmatmul.mubr.bf16.gmra.mrb[0].mxu0 %v1100
    %v1392 = vpop.f32.mrb[0].mxu0
    %v1393 = vadd.f32 %v1351, %v1392
    %v1394 = vpop.f32.mrb[0].mxu0
    %v1395 = vadd.f32 %v1355, %v1394
    %v1396 = vpop.f32.mrb[0].mxu0
    %v1397 = vpop.f32.mrb[0].mxu0
    %1398 = vdwg.mxu0
    %1399 = vmatprep.subr.bf16.mxu0 %v1315
    %1400 = vmatpush1.bf16.msra.mxu0 %v1314
    %1401 = vmatprep.subr.bf16.mxu0 %v1317
    %1402 = vmatpush1.bf16.msra.mxu0 %v1316
    %1403 = vmatprep.subr.bf16.mxu0 %v1319
    %1404 = vmatpush1.bf16.msra.mxu0 %v1318
    %1405 = vmatprep.subr.bf16.mxu0 %v1321
    %1406 = vmatpush1.bf16.msra.mxu0 %v1320
    %1407 = vmatprep.subr.bf16.mxu0 %v1323
    %1408 = vmatpush1.bf16.msra.mxu0 %v1322
    %1409 = vmatprep.subr.bf16.mxu0 %v1325
    %1410 = vmatpush1.bf16.msra.mxu0 %v1324
    %1411 = vmatprep.subr.bf16.mxu0 %v1327
    %1412 = vmatpush1.bf16.msra.mxu0 %v1326
    %1413 = vmatprep.subr.bf16.mxu0 %v1329
    %1414 = vmatpush1.bf16.msra.mxu0 %v1328
    %1415 = vmatprep.subr.bf16.mxu0 %v1331
    %1416 = vmatpush1.bf16.msra.mxu0 %v1330
    %1417 = vmatprep.subr.bf16.mxu0 %v1333
    %1418 = vmatpush1.bf16.msra.mxu0 %v1332
    %1419 = vmatprep.subr.bf16.mxu0 %v1335
    %1420 = vmatpush1.bf16.msra.mxu0 %v1334
    %1421 = vmatprep.subr.bf16.mxu0 %v1337
    %1422 = vmatpush1.bf16.msra.mxu0 %v1336
    %1423 = vmatprep.subr.bf16.mxu0 %v1339
    %1424 = vmatpush1.bf16.msra.mxu0 %v1338
    %1425 = vmatprep.subr.bf16.mxu0 %v1341
    %1426 = vmatpush1.bf16.msra.mxu0 %v1340
    %1427 = vmatprep.subr.bf16.mxu0 %v1343
    %1428 = vmatpush1.bf16.msra.mxu0 %v1342
    %1429 = vmatprep.subr.bf16.mxu0 %v1345
    %1430 = vmatpush1.bf16.msra.mxu0 %v1344
    %1431 = vmatprep.mubr.bf16.mxu0 %v1103
    %1432 = vmatmul.mubr.bf16.gmra.mrb[0].mxu0 %v1102
    %v1433 = vpop.f32.mrb[0].mxu0
    %v1434 = vadd.f32 %v1393, %v1433
    %v1435 = vpop.f32.mrb[0].mxu0
    %v1436 = vadd.f32 %v1395, %v1435
    %v1437 = vpop.f32.mrb[0].mxu0
    %v1438 = vpop.f32.mrb[0].mxu0
    %1439 = vdwg.mxu0
    %v1440 = vxor.u32 %v1434, 2147483648
    %v1441 = vxor.u32 %v1436, 2147483648
    %v1442 = vmul.f32 %v1440, 1.442695
    %v1443 = vpow.pop %v1442
    %v1444 = vmul.f32 %v1441, 1.442695
    %v1445 = vpow.pop %v1444
    %v1446 = vadd.f32 %v1443, 1.0
    %v1447 = vadd.f32 %v1445, 1.0
    %v1448 = vrcp.pop %v1446
    %v1449 = vmul.f32 1.0, %v1448
    %v1450 = vrcp.pop %v1447
    %v1451 = vmul.f32 1.0, %v1450
    %1452 = vst [vmem:[#allocation15 + $0x10] sm:$0xff] %v1449
    %1453 = vst [vmem:[#allocation15 + $0x18] sm:$0xff] %v1451
    %s1454 = sshll.u32 %s1105, 4
    %1455 = dma.done %s209, %s1454
    %v1456 = vld [vmem:[#allocation3 + $0x20] sm:$0xff]
    %v1457 = vld [vmem:[#allocation3 + $0x28] sm:$0xff]
    %v1458 = vld [vmem:[#allocation3 + $0x60] sm:$0xff]
    %v1459 = vld [vmem:[#allocation3 + $0x68] sm:$0xff]
    %v1460 = vld [vmem:[#allocation3 + $0xa0] sm:$0xff]
    %v1461 = vld [vmem:[#allocation3 + $0xa8] sm:$0xff]
    %v1462 = vld [vmem:[#allocation3 + $0xe0] sm:$0xff]
    %v1463 = vld [vmem:[#allocation3 + $0xe8] sm:$0xff]
    %v1464 = vld [vmem:[#allocation3 + $0x120] sm:$0xff]
    %v1465 = vld [vmem:[#allocation3 + $0x128] sm:$0xff]
    %v1466 = vld [vmem:[#allocation3 + $0x160] sm:$0xff]
    %v1467 = vld [vmem:[#allocation3 + $0x168] sm:$0xff]
    %v1468 = vld [vmem:[#allocation3 + $0x1a0] sm:$0xff]
    %v1469 = vld [vmem:[#allocation3 + $0x1a8] sm:$0xff]
    %v1470 = vld [vmem:[#allocation3 + $0x1e0] sm:$0xff]
    %v1471 = vld [vmem:[#allocation3 + $0x1e8] sm:$0xff]
    %v1472 = vld [vmem:[#allocation3 + $0x220] sm:$0xff]
    %v1473 = vld [vmem:[#allocation3 + $0x228] sm:$0xff]
    %v1474 = vld [vmem:[#allocation3 + $0x260] sm:$0xff]
    %v1475 = vld [vmem:[#allocation3 + $0x268] sm:$0xff]
    %v1476 = vld [vmem:[#allocation3 + $0x2a0] sm:$0xff]
    %v1477 = vld [vmem:[#allocation3 + $0x2a8] sm:$0xff]
    %v1478 = vld [vmem:[#allocation3 + $0x2e0] sm:$0xff]
    %v1479 = vld [vmem:[#allocation3 + $0x2e8] sm:$0xff]
    %v1480 = vld [vmem:[#allocation3 + $0x320] sm:$0xff]
    %v1481 = vld [vmem:[#allocation3 + $0x328] sm:$0xff]
    %v1482 = vld [vmem:[#allocation3 + $0x360] sm:$0xff]
    %v1483 = vld [vmem:[#allocation3 + $0x368] sm:$0xff]
    %v1484 = vld [vmem:[#allocation3 + $0x3a0] sm:$0xff]
    %v1485 = vld [vmem:[#allocation3 + $0x3a8] sm:$0xff]
    %v1486 = vld [vmem:[#allocation3 + $0x3e0] sm:$0xff]
    %v1487 = vld [vmem:[#allocation3 + $0x3e8] sm:$0xff]
    %v1488 = vld [vmem:[#allocation3 + $0x420] sm:$0xff]
    %v1489 = vld [vmem:[#allocation3 + $0x428] sm:$0xff]
    %v1490 = vld [vmem:[#allocation3 + $0x460] sm:$0xff]
    %v1491 = vld [vmem:[#allocation3 + $0x468] sm:$0xff]
    %v1492 = vld [vmem:[#allocation3 + $0x4a0] sm:$0xff]
    %v1493 = vld [vmem:[#allocation3 + $0x4a8] sm:$0xff]
    %v1494 = vld [vmem:[#allocation3 + $0x4e0] sm:$0xff]
    %v1495 = vld [vmem:[#allocation3 + $0x4e8] sm:$0xff]
    %v1496 = vld [vmem:[#allocation3 + $0x520] sm:$0xff]
    %v1497 = vld [vmem:[#allocation3 + $0x528] sm:$0xff]
    %v1498 = vld [vmem:[#allocation3 + $0x560] sm:$0xff]
    %v1499 = vld [vmem:[#allocation3 + $0x568] sm:$0xff]
    %v1500 = vld [vmem:[#allocation3 + $0x5a0] sm:$0xff]
    %v1501 = vld [vmem:[#allocation3 + $0x5a8] sm:$0xff]
    %v1502 = vld [vmem:[#allocation3 + $0x5e0] sm:$0xff]
    %v1503 = vld [vmem:[#allocation3 + $0x5e8] sm:$0xff]
    %v1504 = vld [vmem:[#allocation3 + $0x620] sm:$0xff]
    %v1505 = vld [vmem:[#allocation3 + $0x628] sm:$0xff]
    %v1506 = vld [vmem:[#allocation3 + $0x660] sm:$0xff]
    %v1507 = vld [vmem:[#allocation3 + $0x668] sm:$0xff]
    %v1508 = vld [vmem:[#allocation3 + $0x6a0] sm:$0xff]
    %v1509 = vld [vmem:[#allocation3 + $0x6a8] sm:$0xff]
    %v1510 = vld [vmem:[#allocation3 + $0x6e0] sm:$0xff]
    %v1511 = vld [vmem:[#allocation3 + $0x6e8] sm:$0xff]
    %v1512 = vld [vmem:[#allocation3 + $0x720] sm:$0xff]
    %v1513 = vld [vmem:[#allocation3 + $0x728] sm:$0xff]
    %v1514 = vld [vmem:[#allocation3 + $0x760] sm:$0xff]
    %v1515 = vld [vmem:[#allocation3 + $0x768] sm:$0xff]
    %v1516 = vld [vmem:[#allocation3 + $0x7a0] sm:$0xff]
    %v1517 = vld [vmem:[#allocation3 + $0x7a8] sm:$0xff]
    %v1518 = vld [vmem:[#allocation3 + $0x7e0] sm:$0xff]
    %v1519 = vld [vmem:[#allocation3 + $0x7e8] sm:$0xff]
    %v1520 = vld [vmem:[%s11 + $0x4] sm:$0x3]
    %v1522 = vlaneseq
    %v1523 = vshrl.u32 %v1522, 7
    %v1524 = vsub.s32 0, %v1523
    %v1525 = vrot.slane %v1520, %v1524
    %v1526 = vlaneseq
    %v1527 = vshrl.u32 %v1526, 7
    %v1528 = vsub.s32 1, %v1527
    %v1529 = vrot.slane %v1520, %v1528
    %1532 = vmatprep.subr.bf16.mxu0 %v1457
    %1533 = vmatpush1.bf16.msra.mxu0 %v1456
    %1534 = vmatprep.subr.bf16.mxu0 %v1459
    %1535 = vmatpush1.bf16.msra.mxu0 %v1458
    %1536 = vmatprep.subr.bf16.mxu0 %v1461
    %1537 = vmatpush1.bf16.msra.mxu0 %v1460
    %1538 = vmatprep.subr.bf16.mxu0 %v1463
    %1539 = vmatpush1.bf16.msra.mxu0 %v1462
    %1540 = vmatprep.subr.bf16.mxu0 %v1465
    %1541 = vmatpush1.bf16.msra.mxu0 %v1464
    %1542 = vmatprep.subr.bf16.mxu0 %v1467
    %1543 = vmatpush1.bf16.msra.mxu0 %v1466
    %1544 = vmatprep.subr.bf16.mxu0 %v1469
    %1545 = vmatpush1.bf16.msra.mxu0 %v1468
    %1546 = vmatprep.subr.bf16.mxu0 %v1471
    %1547 = vmatpush1.bf16.msra.mxu0 %v1470
    %1548 = vmatprep.subr.bf16.mxu0 %v1473
    %1549 = vmatpush1.bf16.msra.mxu0 %v1472
    %1550 = vmatprep.subr.bf16.mxu0 %v1475
    %1551 = vmatpush1.bf16.msra.mxu0 %v1474
    %1552 = vmatprep.subr.bf16.mxu0 %v1477
    %1553 = vmatpush1.bf16.msra.mxu0 %v1476
    %1554 = vmatprep.subr.bf16.mxu0 %v1479
    %1555 = vmatpush1.bf16.msra.mxu0 %v1478
    %1556 = vmatprep.subr.bf16.mxu0 %v1481
    %1557 = vmatpush1.bf16.msra.mxu0 %v1480
    %1558 = vmatprep.subr.bf16.mxu0 %v1483
    %1559 = vmatpush1.bf16.msra.mxu0 %v1482
    %1560 = vmatprep.subr.bf16.mxu0 %v1485
    %1561 = vmatpush1.bf16.msra.mxu0 %v1484
    %1562 = vmatprep.subr.bf16.mxu0 %v1487
    %1563 = vmatpush1.bf16.msra.mxu0 %v1486
    %1564 = vmatprep.mubr.bf16.mxu0 %v1101
    %1565 = vmatmul.mubr.bf16.gmra.mrb[0].mxu0 %v1100
    %v1566 = vpop.f32.mrb[0].mxu0
    %v1567 = vadd.f32 %v1525, %v1566
    %v1568 = vpop.f32.mrb[0].mxu0
    %v1569 = vadd.f32 %v1529, %v1568
    %v1570 = vpop.f32.mrb[0].mxu0
    %v1571 = vpop.f32.mrb[0].mxu0
    %1572 = vdwg.mxu0
    %1573 = vmatprep.subr.bf16.mxu0 %v1489
    %1574 = vmatpush1.bf16.msra.mxu0 %v1488
    %1575 = vmatprep.subr.bf16.mxu0 %v1491
    %1576 = vmatpush1.bf16.msra.mxu0 %v1490
    %1577 = vmatprep.subr.bf16.mxu0 %v1493
    %1578 = vmatpush1.bf16.msra.mxu0 %v1492
    %1579 = vmatprep.subr.bf16.mxu0 %v1495
    %1580 = vmatpush1.bf16.msra.mxu0 %v1494
    %1581 = vmatprep.subr.bf16.mxu0 %v1497
    %1582 = vmatpush1.bf16.msra.mxu0 %v1496
    %1583 = vmatprep.subr.bf16.mxu0 %v1499
    %1584 = vmatpush1.bf16.msra.mxu0 %v1498
    %1585 = vmatprep.subr.bf16.mxu0 %v1501
    %1586 = vmatpush1.bf16.msra.mxu0 %v1500
    %1587 = vmatprep.subr.bf16.mxu0 %v1503
    %1588 = vmatpush1.bf16.msra.mxu0 %v1502
    %1589 = vmatprep.subr.bf16.mxu0 %v1505
    %1590 = vmatpush1.bf16.msra.mxu0 %v1504
    %1591 = vmatprep.subr.bf16.mxu0 %v1507
    %1592 = vmatpush1.bf16.msra.mxu0 %v1506
    %1593 = vmatprep.subr.bf16.mxu0 %v1509
    %1594 = vmatpush1.bf16.msra.mxu0 %v1508
    %1595 = vmatprep.subr.bf16.mxu0 %v1511
    %1596 = vmatpush1.bf16.msra.mxu0 %v1510
    %1597 = vmatprep.subr.bf16.mxu0 %v1513
    %1598 = vmatpush1.bf16.msra.mxu0 %v1512
    %1599 = vmatprep.subr.bf16.mxu0 %v1515
    %1600 = vmatpush1.bf16.msra.mxu0 %v1514
    %1601 = vmatprep.subr.bf16.mxu0 %v1517
    %1602 = vmatpush1.bf16.msra.mxu0 %v1516
    %1603 = vmatprep.subr.bf16.mxu0 %v1519
    %1604 = vmatpush1.bf16.msra.mxu0 %v1518
    %1605 = vmatprep.mubr.bf16.mxu0 %v1103
    %1606 = vmatmul.mubr.bf16.gmra.mrb[0].mxu0 %v1102
    %v1607 = vpop.f32.mrb[0].mxu0
    %v1608 = vadd.f32 %v1567, %v1607
    %v1609 = vpop.f32.mrb[0].mxu0
    %v1610 = vadd.f32 %v1569, %v1609
    %v1611 = vpop.f32.mrb[0].mxu0
    %v1612 = vpop.f32.mrb[0].mxu0
    %1613 = vdwg.mxu0
    %v1614 = vxor.u32 %v1608, 2147483648
    %v1615 = vxor.u32 %v1610, 2147483648
    %v1616 = vmul.f32 %v1614, 1.442695
    %v1617 = vpow.pop %v1616
    %v1618 = vmul.f32 %v1615, 1.442695
    %v1619 = vpow.pop %v1618
    %v1620 = vadd.f32 %v1617, 1.0
    %v1621 = vadd.f32 %v1619, 1.0
    %v1622 = vrcp.pop %v1620
    %v1623 = vmul.f32 1.0, %v1622
    %v1624 = vrcp.pop %v1621
    %v1625 = vmul.f32 1.0, %v1624
    %1626 = vst [vmem:[#allocation15 + $0x20] sm:$0xff] %v1623
    %1627 = vst [vmem:[#allocation15 + $0x28] sm:$0xff] %v1625
    %s1628 = sshll.u32 %s1105, 4
    %1629 = dma.done %s246, %s1628
    %v1630 = vld [vmem:[#allocation3 + $0x30] sm:$0xff]
    %v1631 = vld [vmem:[#allocation3 + $0x38] sm:$0xff]
    %v1632 = vld [vmem:[#allocation3 + $0x70] sm:$0xff]
    %v1633 = vld [vmem:[#allocation3 + $0x78] sm:$0xff]
    %v1634 = vld [vmem:[#allocation3 + $0xb0] sm:$0xff]
    %v1635 = vld [vmem:[#allocation3 + $0xb8] sm:$0xff]
    %v1636 = vld [vmem:[#allocation3 + $0xf0] sm:$0xff]
    %v1637 = vld [vmem:[#allocation3 + $0xf8] sm:$0xff]
    %v1638 = vld [vmem:[#allocation3 + $0x130] sm:$0xff]
    %v1639 = vld [vmem:[#allocation3 + $0x138] sm:$0xff]
    %v1640 = vld [vmem:[#allocation3 + $0x170] sm:$0xff]
    %v1641 = vld [vmem:[#allocation3 + $0x178] sm:$0xff]
    %v1642 = vld [vmem:[#allocation3 + $0x1b0] sm:$0xff]
    %v1643 = vld [vmem:[#allocation3 + $0x1b8] sm:$0xff]
    %v1644 = vld [vmem:[#allocation3 + $0x1f0] sm:$0xff]
    %v1645 = vld [vmem:[#allocation3 + $0x1f8] sm:$0xff]
    %v1646 = vld [vmem:[#allocation3 + $0x230] sm:$0xff]
    %v1647 = vld [vmem:[#allocation3 + $0x238] sm:$0xff]
    %v1648 = vld [vmem:[#allocation3 + $0x270] sm:$0xff]
    %v1649 = vld [vmem:[#allocation3 + $0x278] sm:$0xff]
    %v1650 = vld [vmem:[#allocation3 + $0x2b0] sm:$0xff]
    %v1651 = vld [vmem:[#allocation3 + $0x2b8] sm:$0xff]
    %v1652 = vld [vmem:[#allocation3 + $0x2f0] sm:$0xff]
    %v1653 = vld [vmem:[#allocation3 + $0x2f8] sm:$0xff]
    %v1654 = vld [vmem:[#allocation3 + $0x330] sm:$0xff]
    %v1655 = vld [vmem:[#allocation3 + $0x338] sm:$0xff]
    %v1656 = vld [vmem:[#allocation3 + $0x370] sm:$0xff]
    %v1657 = vld [vmem:[#allocation3 + $0x378] sm:$0xff]
    %v1658 = vld [vmem:[#allocation3 + $0x3b0] sm:$0xff]
    %v1659 = vld [vmem:[#allocation3 + $0x3b8] sm:$0xff]
    %v1660 = vld [vmem:[#allocation3 + $0x3f0] sm:$0xff]
    %v1661 = vld [vmem:[#allocation3 + $0x3f8] sm:$0xff]
    %v1662 = vld [vmem:[#allocation3 + $0x430] sm:$0xff]
    %v1663 = vld [vmem:[#allocation3 + $0x438] sm:$0xff]
    %v1664 = vld [vmem:[#allocation3 + $0x470] sm:$0xff]
    %v1665 = vld [vmem:[#allocation3 + $0x478] sm:$0xff]
    %v1666 = vld [vmem:[#allocation3 + $0x4b0] sm:$0xff]
    %v1667 = vld [vmem:[#allocation3 + $0x4b8] sm:$0xff]
    %v1668 = vld [vmem:[#allocation3 + $0x4f0] sm:$0xff]
    %v1669 = vld [vmem:[#allocation3 + $0x4f8] sm:$0xff]
    %v1670 = vld [vmem:[#allocation3 + $0x530] sm:$0xff]
    %v1671 = vld [vmem:[#allocation3 + $0x538] sm:$0xff]
    %v1672 = vld [vmem:[#allocation3 + $0x570] sm:$0xff]
    %v1673 = vld [vmem:[#allocation3 + $0x578] sm:$0xff]
    %v1674 = vld [vmem:[#allocation3 + $0x5b0] sm:$0xff]
    %v1675 = vld [vmem:[#allocation3 + $0x5b8] sm:$0xff]
    %v1676 = vld [vmem:[#allocation3 + $0x5f0] sm:$0xff]
    %v1677 = vld [vmem:[#allocation3 + $0x5f8] sm:$0xff]
    %v1678 = vld [vmem:[#allocation3 + $0x630] sm:$0xff]
    %v1679 = vld [vmem:[#allocation3 + $0x638] sm:$0xff]
    %v1680 = vld [vmem:[#allocation3 + $0x670] sm:$0xff]
    %v1681 = vld [vmem:[#allocation3 + $0x678] sm:$0xff]
    %v1682 = vld [vmem:[#allocation3 + $0x6b0] sm:$0xff]
    %v1683 = vld [vmem:[#allocation3 + $0x6b8] sm:$0xff]
    %v1684 = vld [vmem:[#allocation3 + $0x6f0] sm:$0xff]
    %v1685 = vld [vmem:[#allocation3 + $0x6f8] sm:$0xff]
    %v1686 = vld [vmem:[#allocation3 + $0x730] sm:$0xff]
    %v1687 = vld [vmem:[#allocation3 + $0x738] sm:$0xff]
    %v1688 = vld [vmem:[#allocation3 + $0x770] sm:$0xff]
    %v1689 = vld [vmem:[#allocation3 + $0x778] sm:$0xff]
    %v1690 = vld [vmem:[#allocation3 + $0x7b0] sm:$0xff]
    %v1691 = vld [vmem:[#allocation3 + $0x7b8] sm:$0xff]
    %v1692 = vld [vmem:[#allocation3 + $0x7f0] sm:$0xff]
    %v1693 = vld [vmem:[#allocation3 + $0x7f8] sm:$0xff]
    %v1694 = vld [vmem:[%s11 + $0x6] sm:$0x3]
    %v1696 = vlaneseq
    %v1697 = vshrl.u32 %v1696, 7
    %v1698 = vsub.s32 0, %v1697
    %v1699 = vrot.slane %v1694, %v1698
    %v1700 = vlaneseq
    %v1701 = vshrl.u32 %v1700, 7
    %v1702 = vsub.s32 1, %v1701
    %v1703 = vrot.slane %v1694, %v1702
    %1706 = vmatprep.subr.bf16.mxu0 %v1631
    %1707 = vmatpush1.bf16.msra.mxu0 %v1630
    %1708 = vmatprep.subr.bf16.mxu0 %v1633
    %1709 = vmatpush1.bf16.msra.mxu0 %v1632
    %1710 = vmatprep.subr.bf16.mxu0 %v1635
    %1711 = vmatpush1.bf16.msra.mxu0 %v1634
    %1712 = vmatprep.subr.bf16.mxu0 %v1637
    %1713 = vmatpush1.bf16.msra.mxu0 %v1636
    %1714 = vmatprep.subr.bf16.mxu0 %v1639
    %1715 = vmatpush1.bf16.msra.mxu0 %v1638
    %1716 = vmatprep.subr.bf16.mxu0 %v1641
    %1717 = vmatpush1.bf16.msra.mxu0 %v1640
    %1718 = vmatprep.subr.bf16.mxu0 %v1643
    %1719 = vmatpush1.bf16.msra.mxu0 %v1642
    %1720 = vmatprep.subr.bf16.mxu0 %v1645
    %1721 = vmatpush1.bf16.msra.mxu0 %v1644
    %1722 = vmatprep.subr.bf16.mxu0 %v1647
    %1723 = vmatpush1.bf16.msra.mxu0 %v1646
    %1724 = vmatprep.subr.bf16.mxu0 %v1649
    %1725 = vmatpush1.bf16.msra.mxu0 %v1648
    %1726 = vmatprep.subr.bf16.mxu0 %v1651
    %1727 = vmatpush1.bf16.msra.mxu0 %v1650
    %1728 = vmatprep.subr.bf16.mxu0 %v1653
    %1729 = vmatpush1.bf16.msra.mxu0 %v1652
    %1730 = vmatprep.subr.bf16.mxu0 %v1655
    %1731 = vmatpush1.bf16.msra.mxu0 %v1654
    %1732 = vmatprep.subr.bf16.mxu0 %v1657
    %1733 = vmatpush1.bf16.msra.mxu0 %v1656
    %1734 = vmatprep.subr.bf16.mxu0 %v1659
    %1735 = vmatpush1.bf16.msra.mxu0 %v1658
    %1736 = vmatprep.subr.bf16.mxu0 %v1661
    %1737 = vmatpush1.bf16.msra.mxu0 %v1660
    %1738 = vmatprep.mubr.bf16.mxu0 %v1101
    %1739 = vmatmul.mubr.bf16.gmra.mrb[0].mxu0 %v1100
    %v1740 = vpop.f32.mrb[0].mxu0
    %v1741 = vadd.f32 %v1699, %v1740
    %v1742 = vpop.f32.mrb[0].mxu0
    %v1743 = vadd.f32 %v1703, %v1742
    %v1744 = vpop.f32.mrb[0].mxu0
    %v1745 = vpop.f32.mrb[0].mxu0
    %1746 = vdwg.mxu0
    %1747 = vmatprep.subr.bf16.mxu0 %v1663
    %1748 = vmatpush1.bf16.msra.mxu0 %v1662
    %1749 = vmatprep.subr.bf16.mxu0 %v1665
    %1750 = vmatpush1.bf16.msra.mxu0 %v1664
    %1751 = vmatprep.subr.bf16.mxu0 %v1667
    %1752 = vmatpush1.bf16.msra.mxu0 %v1666
    %1753 = vmatprep.subr.bf16.mxu0 %v1669
    %1754 = vmatpush1.bf16.msra.mxu0 %v1668
    %1755 = vmatprep.subr.bf16.mxu0 %v1671
    %1756 = vmatpush1.bf16.msra.mxu0 %v1670
    %1757 = vmatprep.subr.bf16.mxu0 %v1673
    %1758 = vmatpush1.bf16.msra.mxu0 %v1672
    %1759 = vmatprep.subr.bf16.mxu0 %v1675
    %1760 = vmatpush1.bf16.msra.mxu0 %v1674
    %1761 = vmatprep.subr.bf16.mxu0 %v1677
    %1762 = vmatpush1.bf16.msra.mxu0 %v1676
    %1763 = vmatprep.subr.bf16.mxu0 %v1679
    %1764 = vmatpush1.bf16.msra.mxu0 %v1678
    %1765 = vmatprep.subr.bf16.mxu0 %v1681
    %1766 = vmatpush1.bf16.msra.mxu0 %v1680
    %1767 = vmatprep.subr.bf16.mxu0 %v1683
    %1768 = vmatpush1.bf16.msra.mxu0 %v1682
    %1769 = vmatprep.subr.bf16.mxu0 %v1685
    %1770 = vmatpush1.bf16.msra.mxu0 %v1684
    %1771 = vmatprep.subr.bf16.mxu0 %v1687
    %1772 = vmatpush1.bf16.msra.mxu0 %v1686
    %1773 = vmatprep.subr.bf16.mxu0 %v1689
    %1774 = vmatpush1.bf16.msra.mxu0 %v1688
    %1775 = vmatprep.subr.bf16.mxu0 %v1691
    %1776 = vmatpush1.bf16.msra.mxu0 %v1690
    %1777 = vmatprep.subr.bf16.mxu0 %v1693
    %1778 = vmatpush1.bf16.msra.mxu0 %v1692
    %1779 = vmatprep.mubr.bf16.mxu0 %v1103
    %1780 = vmatmul.mubr.bf16.gmra.mrb[0].mxu0 %v1102
    %v1781 = vpop.f32.mrb[0].mxu0
    %v1782 = vadd.f32 %v1741, %v1781
    %v1783 = vpop.f32.mrb[0].mxu0
    %v1784 = vadd.f32 %v1743, %v1783
    %v1785 = vpop.f32.mrb[0].mxu0
    %v1786 = vpop.f32.mrb[0].mxu0
    %1787 = vdwg.mxu0
    %v1788 = vxor.u32 %v1782, 2147483648
    %v1789 = vxor.u32 %v1784, 2147483648
    %v1790 = vmul.f32 %v1788, 1.442695
    %v1791 = vpow.pop %v1790
    %v1792 = vmul.f32 %v1789, 1.442695
    %v1793 = vpow.pop %v1792
    %v1794 = vadd.f32 %v1791, 1.0
    %v1795 = vadd.f32 %v1793, 1.0
    %v1796 = vrcp.pop %v1794
    %v1797 = vmul.f32 1.0, %v1796
    %v1798 = vrcp.pop %v1795
    %v1799 = vmul.f32 1.0, %v1798
    %1800 = vst [vmem:[#allocation15 + $0x30] sm:$0xff] %v1797
    %1801 = vst [vmem:[#allocation15 + $0x38] sm:$0xff] %v1799
    // Predicated region
    $region62: #{tpu_custom_call.1} parent=1 // pred_check
      _
    $region63: #{tpu_custom_call.1} parent=1 // pred_check_branch
      %1803 = sbr.rel (0) target = $region65
    $region64: #{tpu_custom_call.1} parent=1 // pred_region
      %s1805 = ssub.s32 1024, 1024
      %1806 = vsyncadd [#allocation8], %s1805
      %s1808 = sshll.u32 [#allocation15], 4
      %s1809 = int_to_ptr.vmem [resolvable:$true] %s1808
      %1811 = dma.vmem_to_hbm [thread:$0]  %s1809, 1024, %s12, [#allocation8]
    $region65: #{tpu_custom_call.1} parent=1 // pred_fallthru
      _
    // Predicated region
    $region66: #{tpu_custom_call.1} parent=1 // pred_check
      _
    $region67: #{tpu_custom_call.1} parent=1 // pred_check_branch
      %1813 = sbr.rel (0) target = $region69
    $region68: #{tpu_custom_call.1} parent=1 // pred_region
      %1814 = dma.done [#allocation8], 1024
    $region69: #{tpu_custom_call.1} parent=1 // pred_fallthru
      _
    %1815 = vsyncpa [#allocation7], 1
    %1816 = vsyncpa [#allocation10], 1
    %1817 = vsyncpa [#allocation13], 1
    %1818 = vsyncpa [#allocation8], 1
  %1819 = vsyncmov [#allocation4]
  %s1820 = vpop.sfrf %1819
  %p1821 = scmp.eq.s32.totalorder %s1820, 0
  %p1822 = pneg %p1821
  %1824 = shalt.err (%p1822)
  %1825 = vsyncmov [#allocation5]
  %s1826 = vpop.sfrf %1825
  %p1827 = scmp.eq.s32.totalorder %s1826, 0
  %p1828 = pneg %p1827
  %1830 = shalt.err (%p1828)
  %s1831 = scalar_lea.sflag [#allocation5], 1
  %1832 = vsyncmov %s1831
  %s1833 = vpop.sfrf %1832
  %p1834 = scmp.eq.s32.totalorder %s1833, 0
  %p1835 = pneg %p1834
  %1837 = shalt.err (%p1835)
  %s1838 = scalar_lea.sflag [#allocation5], 2
  %1839 = vsyncmov %s1838
  %s1840 = vpop.sfrf %1839
  %p1841 = scmp.eq.s32.totalorder %s1840, 0
  %p1842 = pneg %p1841
  %1844 = shalt.err (%p1842)
  %s1845 = scalar_lea.sflag [#allocation5], 3
  %1846 = vsyncmov %s1845
  %s1847 = vpop.sfrf %1846
  %p1848 = scmp.eq.s32.totalorder %s1847, 0
  %p1849 = pneg %p1848
  %1851 = shalt.err (%p1849)

</llo_original>
